<compile_context>
chip_gen: v7x
topology: tpu7x:2x2x1
jax: 0.10.0
libtpu: 0.0.40
codegen_flags: <defaults>
</compile_context>

<pallas_src>
import jax
import jax.numpy as jnp
from jax.experimental import pallas as pl
from jax.experimental.pallas import tpu as pltpu

# ---- small synthetic config implied by the module's forward pass ----
B, S, D = 2, 8, 32          # batch, sequence, hidden
H, DH = 4, 8                # heads, head dim (H * DH == D)
HD = H * DH
F = 64                      # CLT (cross-layer transcoder) feature width
V = 64                      # vocabulary size
VPAD = 128                  # lane-dense logits width (padded, sliced back to V)
L = 2                       # transformer layers
MLP_HID = 4 * D             # original-model MLP hidden (only used for error terms)
EPS = 1e-5
NEG = -1e9
BS = B * S
PW = 2 * HD + H * D         # fused projection width: [q | k | vo_0 .. vo_{H-1}]

assert HD == D and BS <= D and V <= VPAD

# ---- slab32 row layout (lane width = D) ----
R_H0 = 0                    # initial residual stream           (BS rows)
R_MASK = R_H0 + BS          # additive attention bias, padded   (BS rows, lanes [:BS])
R_ERR = R_MASK + BS         # cached error terms, layer-major   (L*BS rows)
R_WDEC = R_ERR + L * BS     # CLT decoder weight                (F rows)
R_LN1G = R_WDEC + F         # per-layer LN1 gamma               (L rows)
R_LN1B = R_LN1G + L         # per-layer LN1 beta                (L rows)
R_BO = R_LN1B + L           # per-layer attention output bias   (L rows)
R_BDEC = R_BO + L           # CLT decoder bias                  (1 row)
R_LNFG = R_BDEC + 1         # final LN gamma                    (1 row)
R_LNFB = R_LNFG + 1         # final LN beta                     (1 row)
N32 = R_LNFB + 1


# ----------------------------------------------------------------------------
# Pallas kernel: the entire local-replacement forward (gridless, VMEM-resident)
#   for each layer:
#     h <- h + Attn(input_layernorm(h))         (Wo folded into V projection)
#     h <- h + (CLT(h) + cached error term)     (MLP replaced by CLT + error)
#   logits <- lm_head(final_layernorm(h))       (V padded to 128 lanes)
# ----------------------------------------------------------------------------
def _fused_forward_kernel(s32_ref, sp_ref, s64_ref, s128_ref, out_ref):
    h = s32_ref[R_H0:R_H0 + BS, :]                       # (BS, D) residual stream
    mask = s32_ref[R_MASK:R_MASK + BS, :BS]              # (BS, BS) causal + batch + key pad

    wenc = s64_ref[:D, :]                                # (D, F)
    benc = s64_ref[D:D + 1, :]                           # (1, F)
    wdec = s32_ref[R_WDEC:R_WDEC + F, :]                 # (F, D)
    bdec = s32_ref[R_BDEC:R_BDEC + 1, :]                 # (1, D)

    for l in range(L):                                   # static unroll over layers
        ln_g = s32_ref[R_LN1G + l:R_LN1G + l + 1, :]
        ln_b = s32_ref[R_LN1B + l:R_LN1B + l + 1, :]
        bo = s32_ref[R_BO + l:R_BO + l + 1, :]

        # input_layernorm
        mean = jnp.mean(h, axis=-1, keepdims=True)
        var = jnp.mean((h - mean) ** 2, axis=-1, keepdims=True)
        xn = (h - mean) * jax.lax.rsqrt(var + EPS) * ln_g + ln_b

        # fused projection: [q*1/sqrt(DH) | k | v@Wo per head]  ->  (BS, PW)
        wp = sp_ref[l * D:(l + 1) * D, :]
        bp = sp_ref[L * D + l:L * D + l + 1, :]
        proj = jnp.dot(xn, wp, preferred_element_type=jnp.float32) + bp

        acc = None
        for hh in range(H):                              # static head loop
            q = proj[:, hh * DH:(hh + 1) * DH]                       # (BS, DH)
            k = proj[:, HD + hh * DH:HD + (hh + 1) * DH]             # (BS, DH)
            vo = proj[:, 2 * HD + hh * D:2 * HD + (hh + 1) * D]      # (BS, D)
            # q . k contracting last dims — no explicit transpose of k
            s = jax.lax.dot_general(q, k, (((1,), (1,)), ((), ())),
                                    preferred_element_type=jnp.float32)
            # No max-subtraction: scores are O(1) and the -1e9 mask underflows
            # to exp()=0; the causal diagonal guarantees a nonzero denominator.
            p = jnp.exp(s + mask)
            p = p * pl.reciprocal(jnp.sum(p, axis=-1, keepdims=True), approx=True)
            hv = jnp.dot(p, vo, preferred_element_type=jnp.float32)  # (BS, D)
            acc = hv if acc is None else acc + hv
        h = h + acc + bo                                 # residual after attention

        # CLT reconstruction (ReLU transcoder) + cached error-adjustment term
        feat = jnp.maximum(
            jnp.dot(h, wenc, preferred_element_type=jnp.float32) + benc, 0.0)
        recon = jnp.dot(feat, wdec, preferred_element_type=jnp.float32) + bdec
        err = s32_ref[R_ERR + l * BS:R_ERR + (l + 1) * BS, :]
        h = h + recon + err

    # final layernorm + lm_head (padded to 128 lanes -> lane-dense store)
    mean = jnp.mean(h, axis=-1, keepdims=True)
    var = jnp.mean((h - mean) ** 2, axis=-1, keepdims=True)
    xn = (h - mean) * jax.lax.rsqrt(var + EPS) * s32_ref[R_LNFG:R_LNFG + 1, :] \
         + s32_ref[R_LNFB:R_LNFB + 1, :]
    out_ref[...] = jnp.dot(xn, s128_ref[:D, :], preferred_element_type=jnp.float32) \
                   + s128_ref[D:D + 1, :]


# ----------------------------------------------------------------------------
# Host-side (trace-time) weight re-packing into lane-width-grouped slabs
# ----------------------------------------------------------------------------
def _pack_weights(params):
    scale = 1.0 / (DH ** 0.5)

    def flat_w(w):                                   # (H, D, DH) -> (D, H*DH)
        return jnp.transpose(w, (1, 0, 2)).reshape(D, HD)

    def flat_b(b):                                   # (H, 1, DH) -> (1, H*DH)
        return jnp.transpose(b, (1, 0, 2)).reshape(1, HD)

    proj_w, proj_b, ln1g, ln1b, bo = [], [], [], [], []
    for lp in params['layers']:
        # fold the output projection into the value projection, per head
        wvo = jnp.concatenate([lp['wv'][hh] @ lp['wo'][hh] for hh in range(H)], axis=-1)  # (D, H*D)
        bvo = jnp.concatenate([lp['bv'][hh] @ lp['wo'][hh] for hh in range(H)], axis=-1)  # (1, H*D)
        proj_w.append(jnp.concatenate(
            [flat_w(lp['wq']) * scale, flat_w(lp['wk']), wvo], axis=-1))                  # (D, PW)
        proj_b.append(jnp.concatenate(
            [flat_b(lp['bq']) * scale, flat_b(lp['bk']), bvo], axis=-1))                  # (1, PW)
        ln1g.append(lp['ln1_g']); ln1b.append(lp['ln1_b']); bo.append(lp['bo'])

    slab_p = jnp.concatenate(proj_w + proj_b, axis=0)                     # (L*D + L, PW)

    clt = params['clt']
    slab_enc = jnp.concatenate([clt['wenc'], clt['benc']], axis=0)        # (D+1, F)
    slab_lm = jnp.concatenate(
        [jnp.pad(params['wlm'], ((0, 0), (0, VPAD - V))),
         jnp.pad(params['blm'], ((0, 0), (0, VPAD - V)))], axis=0)        # (D+1, VPAD)

    vec32 = jnp.concatenate(
        ln1g + ln1b + bo + [clt['bdec'], params['lnf_g'], params['lnf_b']], axis=0)
    return slab_p, slab_enc, slab_lm, vec32


def local_replacement_forward(input_ids, attention_mask, params, error_terms):
    """forward() of LocalReplacementModel implemented as one gridless Pallas kernel."""
    # TODO(synk): use_cache and the (unused) current_layer_outputs / hook bookkeeping
    # from the PyTorch forward do not affect the returned logits and are not reproduced.
    slab_p, slab_enc, slab_lm, vec32 = _pack_weights(params)

    h0 = params['wte'][input_ids].reshape(BS, D)     # embedding gather: plain-JAX glue

    # causal + same-batch block-diagonal mask + additive key-padding bias (BS, BS)
    row = jnp.arange(BS)[:, None]
    col = jnp.arange(BS)[None, :]
    ok = (col <= row) & ((row // S) == (col // S))
    kbias = ((1.0 - attention_mask.astype(jnp.float32)) * NEG).reshape(1, BS)
    mask_bias = jnp.where(ok, 0.0, NEG) + kbias
    mask_pad = jnp.pad(mask_bias, ((0, 0), (0, D - BS)))        # pad lanes to D

    err = jnp.concatenate([e.reshape(BS, D) for e in error_terms], axis=0)   # (L*BS, D)
    slab32 = jnp.concatenate(
        [h0, mask_pad, err, params['clt']['wdec'], vec32], axis=0)
    assert slab32.shape == (N32, D)

    vspec = pl.BlockSpec(memory_space=pltpu.MemorySpace.VMEM)
    logits_pad = pl.pallas_call(
        _fused_forward_kernel,
        out_shape=jax.ShapeDtypeStruct((BS, VPAD), jnp.float32),
        in_specs=[vspec, vspec, vspec, vspec],
        out_specs=vspec,
    )(slab32, slab_p, slab_enc, slab_lm)

    return logits_pad[:, :V].reshape(B, S, V)


# ----------------------------------------------------------------------------
# Plain-JAX reference pieces (used for __init__-style caching / error terms
# and for a correctness check of the Pallas forward)
# ----------------------------------------------------------------------------
def ref_layernorm(x, g, b):
    m = jnp.mean(x, -1, keepdims=True)
    v = jnp.mean((x - m) ** 2, -1, keepdims=True)
    return (x - m) * jax.lax.rsqrt(v + EPS) * g + b


def ref_attention(xn, key_bias, lp):
    q = jnp.einsum('bsd,hde->bhse', xn, lp['wq']) + lp['bq'][None]
    k = jnp.einsum('bsd,hde->bhse', xn, lp['wk']) + lp['bk'][None]
    v = jnp.einsum('bsd,hde->bhse', xn, lp['wv']) + lp['bv'][None]
    s = jnp.einsum('bhqe,bhke->bhqk', q, k) / jnp.sqrt(jnp.float32(DH))
    causal = jnp.where(jnp.arange(S)[:, None] >= jnp.arange(S)[None, :], 0.0, NEG)
    s = s + causal[None, None] + key_bias[:, None]
    p = jax.nn.softmax(s, axis=-1)
    o = jnp.einsum('bhqk,bhke->bhqe', p, v)
    return jnp.einsum('bhse,hed->bsd', o, lp['wo']) + lp['bo']


def ref_mlp(xn, lp):
    return jax.nn.gelu(xn @ lp['w1'] + lp['b1']) @ lp['w2'] + lp['b2']


def ref_clt(x, clt):
    return jnp.maximum(x @ clt['wenc'] + clt['benc'], 0.0) @ clt['wdec'] + clt['bdec']


def compute_error_terms(prompt_ids, prompt_mask, params):
    """__init__ equivalent: run the 'original model' on the prompt, cache the
    residual stream (layer outputs) and MLP outputs, and compute
    error_terms[l] = mlp_out[l] - CLT(layer_out)[l].  Pure parameter setup."""
    key_bias = (1.0 - prompt_mask.astype(jnp.float32))[:, None, :] * NEG
    h = params['wte'][prompt_ids]
    layer_outs, mlp_outs = [], []
    for lp in params['layers']:
        h = h + ref_attention(ref_layernorm(h, lp['ln1_g'], lp['ln1_b']), key_bias, lp)
        mlp_out = ref_mlp(ref_layernorm(h, lp['ln2_g'], lp['ln2_b']), lp)
        h = h + mlp_out
        layer_outs.append(h)
        mlp_outs.append(mlp_out)
    recons = [ref_clt(x, params['clt']) for x in layer_outs]
    return [m - r for m, r in zip(mlp_outs, recons)]


def ref_forward(input_ids, attention_mask, params, error_terms):
    key_bias = (1.0 - attention_mask.astype(jnp.float32))[:, None, :] * NEG
    h = params['wte'][input_ids]
    for i, lp in enumerate(params['layers']):
        h = h + ref_attention(ref_layernorm(h, lp['ln1_g'], lp['ln1_b']), key_bias, lp)
        h = h + (ref_clt(h, params['clt']) + error_terms[i])
    hf = ref_layernorm(h, params['lnf_g'], params['lnf_b'])
    return hf @ params['wlm'] + params['blm']


def init_params(key):
    keys = iter(jax.random.split(key, 64))
    nrm = lambda shape, s=0.05: s * jax.random.normal(next(keys), shape, jnp.float32)
    layers = []
    for _ in range(L):
        layers.append(dict(
            ln1_g=1.0 + nrm((1, D), 0.01), ln1_b=nrm((1, D), 0.01),
            ln2_g=1.0 + nrm((1, D), 0.01), ln2_b=nrm((1, D), 0.01),
            wq=nrm((H, D, DH)), bq=nrm((H, 1, DH), 0.01),
            wk=nrm((H, D, DH)), bk=nrm((H, 1, DH), 0.01),
            wv=nrm((H, D, DH)), bv=nrm((H, 1, DH), 0.01),
            wo=nrm((H, DH, D)), bo=nrm((1, D), 0.01),
            w1=nrm((D, MLP_HID)), b1=nrm((1, MLP_HID), 0.01),
            w2=nrm((MLP_HID, D)), b2=nrm((1, D), 0.01),
        ))
    return dict(
        wte=nrm((V, D), 0.1),
        layers=layers,
        clt=dict(wenc=nrm((D, F)), benc=nrm((1, F), 0.01),
                 wdec=nrm((F, D)), bdec=nrm((1, D), 0.01)),
        lnf_g=1.0 + nrm((1, D), 0.01), lnf_b=nrm((1, D), 0.01),
        wlm=nrm((D, V)), blm=nrm((1, V), 0.01),
    )


if __name__ == "__main__":
    key = jax.random.PRNGKey(0)
    pkey, ikey = jax.random.split(key)
    params = init_params(pkey)

    # The prompt the model was "locally replaced" on; forward is run on the same prompt.
    prompt_ids = jax.random.randint(ikey, (B, S), 0, V)
    prompt_mask = jnp.ones((B, S), jnp.int32)

    # __init__-equivalent setup: cache activations + compute CLT error terms.
    error_terms = compute_error_terms(prompt_ids, prompt_mask, params)

    # forward() via the single fused Pallas kernel.
    logits = local_replacement_forward(prompt_ids, prompt_mask, params, error_terms)
    logits = jax.block_until_ready(logits)

    ref = ref_forward(prompt_ids, prompt_mask, params, error_terms)
    assert logits.shape == (B, S, V)
    max_err = float(jnp.max(jnp.abs(logits - ref)))
    # Tolerance 1e-3: softmax denominator uses the EUP approximate reciprocal
    # (pl.reciprocal(approx=True)); everything else is f32.
    assert jnp.allclose(logits, ref, atol=1e-3, rtol=1e-3), max_err
    print("KERNEL_OK")
</pallas_src>

<mosaic_0001>
module attributes {stable_mosaic.version = 11 : i64} {
  func.func @_fused_forward_kernel(%arg0: memref<137x32xf32, #tpu.memory_space<vmem>>, %arg1: memref<66x192xf32, #tpu.memory_space<vmem>>, %arg2: memref<33x64xf32, #tpu.memory_space<vmem>>, %arg3: memref<33x128xf32, #tpu.memory_space<vmem>>, %arg4: memref<16x128xf32, #tpu.memory_space<vmem>>) attributes {dimension_semantics = [], scalar_prefetch = 0 : i64, scratch_operands = 0 : i64, tpu.core_type = #tpu.core_type<tc>} {
    %c0 = arith.constant 0 : index
    %c0_0 = arith.constant 0 : index
    %0 = vector.load %arg0[%c0, %c0_0] : memref<137x32xf32, #tpu.memory_space<vmem>>, vector<16x32xf32>
    %c16 = arith.constant 16 : index
    %c0_1 = arith.constant 0 : index
    %1 = vector.load %arg0[%c16, %c0_1] : memref<137x32xf32, #tpu.memory_space<vmem>>, vector<16x16xf32>
    %c0_2 = arith.constant 0 : index
    %c0_3 = arith.constant 0 : index
    %2 = vector.load %arg2[%c0_2, %c0_3] : memref<33x64xf32, #tpu.memory_space<vmem>>, vector<32x64xf32>
    %c32 = arith.constant 32 : index
    %c0_4 = arith.constant 0 : index
    %3 = vector.load %arg2[%c32, %c0_4] : memref<33x64xf32, #tpu.memory_space<vmem>>, vector<1x64xf32>
    %c64 = arith.constant 64 : index
    %c0_5 = arith.constant 0 : index
    %4 = vector.load %arg0[%c64, %c0_5] : memref<137x32xf32, #tpu.memory_space<vmem>>, vector<64x32xf32>
    %c134 = arith.constant 134 : index
    %c0_6 = arith.constant 0 : index
    %5 = vector.load %arg0[%c134, %c0_6] : memref<137x32xf32, #tpu.memory_space<vmem>>, vector<1x32xf32>
    %c128 = arith.constant 128 : index
    %c0_7 = arith.constant 0 : index
    %6 = vector.load %arg0[%c128, %c0_7] : memref<137x32xf32, #tpu.memory_space<vmem>>, vector<1x32xf32>
    %c130 = arith.constant 130 : index
    %c0_8 = arith.constant 0 : index
    %7 = vector.load %arg0[%c130, %c0_8] : memref<137x32xf32, #tpu.memory_space<vmem>>, vector<1x32xf32>
    %c132 = arith.constant 132 : index
    %c0_9 = arith.constant 0 : index
    %8 = vector.load %arg0[%c132, %c0_9] : memref<137x32xf32, #tpu.memory_space<vmem>>, vector<1x32xf32>
    %cst = arith.constant dense<0.000000e+00> : vector<16xf32>
    %9 = vector.multi_reduction <add>, %0, %cst [1] : vector<16x32xf32> to vector<16xf32>
    %10 = vector.shape_cast %9 : vector<16xf32> to vector<16x1xf32>
    %cst_10 = arith.constant 3.200000e+01 : f32
    %11 = vector.broadcast %cst_10 : f32 to vector<16x1xf32>
    %12 = arith.divf %10, %11 : vector<16x1xf32>
    %13 = vector.broadcast %12 : vector<16x1xf32> to vector<16x32xf32>
    %14 = arith.subf %0, %13 : vector<16x32xf32>
    %15 = arith.mulf %14, %14 : vector<16x32xf32>
    %cst_11 = arith.constant dense<0.000000e+00> : vector<16xf32>
    %16 = vector.multi_reduction <add>, %15, %cst_11 [1] : vector<16x32xf32> to vector<16xf32>
    %17 = vector.shape_cast %16 : vector<16xf32> to vector<16x1xf32>
    %cst_12 = arith.constant 3.200000e+01 : f32
    %18 = vector.broadcast %cst_12 : f32 to vector<16x1xf32>
    %19 = arith.divf %17, %18 : vector<16x1xf32>
    %20 = vector.broadcast %12 : vector<16x1xf32> to vector<16x32xf32>
    %21 = arith.subf %0, %20 : vector<16x32xf32>
    %cst_13 = arith.constant 9.99999974E-6 : f32
    %22 = vector.broadcast %cst_13 : f32 to vector<16x1xf32>
    %23 = arith.addf %19, %22 : vector<16x1xf32>
    %24 = math.rsqrt %23 : vector<16x1xf32>
    %25 = vector.broadcast %24 : vector<16x1xf32> to vector<16x32xf32>
    %26 = arith.mulf %21, %25 : vector<16x32xf32>
    %27 = vector.broadcast %6 : vector<1x32xf32> to vector<16x32xf32>
    %28 = arith.mulf %26, %27 : vector<16x32xf32>
    %29 = vector.broadcast %7 : vector<1x32xf32> to vector<16x32xf32>
    %30 = arith.addf %28, %29 : vector<16x32xf32>
    %c0_14 = arith.constant 0 : index
    %c0_15 = arith.constant 0 : index
    %31 = vector.load %arg1[%c0_14, %c0_15] : memref<66x192xf32, #tpu.memory_space<vmem>>, vector<32x192xf32>
    %c64_16 = arith.constant 64 : index
    %c0_17 = arith.constant 0 : index
    %32 = vector.load %arg1[%c64_16, %c0_17] : memref<66x192xf32, #tpu.memory_space<vmem>>, vector<1x192xf32>
    %cst_18 = arith.constant dense<0.000000e+00> : vector<16x192xf32>
    %33 = tpu.matmul %30, %31, %cst_18 {dimension_numbers = #tpu.dot_dimension_numbers<[1], [0], [0], [1], [0, 0, 1, 1], [], []>} : vector<16x32xf32>, vector<32x192xf32>, vector<16x192xf32> -> vector<16x192xf32>
    %34 = vector.broadcast %32 : vector<1x192xf32> to vector<16x192xf32>
    %35 = arith.addf %33, %34 : vector<16x192xf32>
    %36 = vector.extract_strided_slice %35 {offsets = [0, 0], sizes = [16, 8], strides = [1, 1]} : vector<16x192xf32> to vector<16x8xf32>
    %37 = vector.extract_strided_slice %35 {offsets = [0, 32], sizes = [16, 8], strides = [1, 1]} : vector<16x192xf32> to vector<16x8xf32>
    %38 = vector.extract_strided_slice %35 {offsets = [0, 64], sizes = [16, 32], strides = [1, 1]} : vector<16x192xf32> to vector<16x32xf32>
    %cst_19 = arith.constant dense<0.000000e+00> : vector<16x16xf32>
    %39 = tpu.matmul %36, %37, %cst_19 {dimension_numbers = #tpu.dot_dimension_numbers<[1], [1], [0], [0], [0, 0, 1, 0], [], []>} : vector<16x8xf32>, vector<16x8xf32>, vector<16x16xf32> -> vector<16x16xf32>
    %40 = arith.addf %39, %1 : vector<16x16xf32>
    %41 = math.exp %40 : vector<16x16xf32>
    %cst_20 = arith.constant dense<0.000000e+00> : vector<16xf32>
    %42 = vector.multi_reduction <add>, %41, %cst_20 [1] : vector<16x16xf32> to vector<16xf32>
    %43 = vector.shape_cast %42 : vector<16xf32> to vector<16x1xf32>
    %44 = tpu.reciprocal %43 {approx = true} : vector<16x1xf32> -> vector<16x1xf32>
    %45 = vector.broadcast %44 : vector<16x1xf32> to vector<16x16xf32>
    %46 = arith.mulf %41, %45 : vector<16x16xf32>
    %cst_21 = arith.constant dense<0.000000e+00> : vector<16x32xf32>
    %47 = tpu.matmul %46, %38, %cst_21 {dimension_numbers = #tpu.dot_dimension_numbers<[1], [0], [0], [1], [0, 0, 1, 1], [], []>} : vector<16x16xf32>, vector<16x32xf32>, vector<16x32xf32> -> vector<16x32xf32>
    %48 = vector.extract_strided_slice %35 {offsets = [0, 8], sizes = [16, 8], strides = [1, 1]} : vector<16x192xf32> to vector<16x8xf32>
    %49 = vector.extract_strided_slice %35 {offsets = [0, 40], sizes = [16, 8], strides = [1, 1]} : vector<16x192xf32> to vector<16x8xf32>
    %50 = vector.extract_strided_slice %35 {offsets = [0, 96], sizes = [16, 32], strides = [1, 1]} : vector<16x192xf32> to vector<16x32xf32>
    %cst_22 = arith.constant dense<0.000000e+00> : vector<16x16xf32>
    %51 = tpu.matmul %48, %49, %cst_22 {dimension_numbers = #tpu.dot_dimension_numbers<[1], [1], [0], [0], [0, 0, 1, 0], [], []>} : vector<16x8xf32>, vector<16x8xf32>, vector<16x16xf32> -> vector<16x16xf32>
    %52 = arith.addf %51, %1 : vector<16x16xf32>
    %53 = math.exp %52 : vector<16x16xf32>
    %cst_23 = arith.constant dense<0.000000e+00> : vector<16xf32>
    %54 = vector.multi_reduction <add>, %53, %cst_23 [1] : vector<16x16xf32> to vector<16xf32>
    %55 = vector.shape_cast %54 : vector<16xf32> to vector<16x1xf32>
    %56 = tpu.reciprocal %55 {approx = true} : vector<16x1xf32> -> vector<16x1xf32>
    %57 = vector.broadcast %56 : vector<16x1xf32> to vector<16x16xf32>
    %58 = arith.mulf %53, %57 : vector<16x16xf32>
    %cst_24 = arith.constant dense<0.000000e+00> : vector<16x32xf32>
    %59 = tpu.matmul %58, %50, %cst_24 {dimension_numbers = #tpu.dot_dimension_numbers<[1], [0], [0], [1], [0, 0, 1, 1], [], []>} : vector<16x16xf32>, vector<16x32xf32>, vector<16x32xf32> -> vector<16x32xf32>
    %60 = arith.addf %47, %59 : vector<16x32xf32>
    %61 = vector.extract_strided_slice %35 {offsets = [0, 16], sizes = [16, 8], strides = [1, 1]} : vector<16x192xf32> to vector<16x8xf32>
    %62 = vector.extract_strided_slice %35 {offsets = [0, 48], sizes = [16, 8], strides = [1, 1]} : vector<16x192xf32> to vector<16x8xf32>
    %63 = vector.extract_strided_slice %35 {offsets = [0, 128], sizes = [16, 32], strides = [1, 1]} : vector<16x192xf32> to vector<16x32xf32>
    %cst_25 = arith.constant dense<0.000000e+00> : vector<16x16xf32>
    %64 = tpu.matmul %61, %62, %cst_25 {dimension_numbers = #tpu.dot_dimension_numbers<[1], [1], [0], [0], [0, 0, 1, 0], [], []>} : vector<16x8xf32>, vector<16x8xf32>, vector<16x16xf32> -> vector<16x16xf32>
    %65 = arith.addf %64, %1 : vector<16x16xf32>
    %66 = math.exp %65 : vector<16x16xf32>
    %cst_26 = arith.constant dense<0.000000e+00> : vector<16xf32>
    %67 = vector.multi_reduction <add>, %66, %cst_26 [1] : vector<16x16xf32> to vector<16xf32>
    %68 = vector.shape_cast %67 : vector<16xf32> to vector<16x1xf32>
    %69 = tpu.reciprocal %68 {approx = true} : vector<16x1xf32> -> vector<16x1xf32>
    %70 = vector.broadcast %69 : vector<16x1xf32> to vector<16x16xf32>
    %71 = arith.mulf %66, %70 : vector<16x16xf32>
    %cst_27 = arith.constant dense<0.000000e+00> : vector<16x32xf32>
    %72 = tpu.matmul %71, %63, %cst_27 {dimension_numbers = #tpu.dot_dimension_numbers<[1], [0], [0], [1], [0, 0, 1, 1], [], []>} : vector<16x16xf32>, vector<16x32xf32>, vector<16x32xf32> -> vector<16x32xf32>
    %73 = arith.addf %60, %72 : vector<16x32xf32>
    %74 = vector.extract_strided_slice %35 {offsets = [0, 24], sizes = [16, 8], strides = [1, 1]} : vector<16x192xf32> to vector<16x8xf32>
    %75 = vector.extract_strided_slice %35 {offsets = [0, 56], sizes = [16, 8], strides = [1, 1]} : vector<16x192xf32> to vector<16x8xf32>
    %76 = vector.extract_strided_slice %35 {offsets = [0, 160], sizes = [16, 32], strides = [1, 1]} : vector<16x192xf32> to vector<16x32xf32>
    %cst_28 = arith.constant dense<0.000000e+00> : vector<16x16xf32>
    %77 = tpu.matmul %74, %75, %cst_28 {dimension_numbers = #tpu.dot_dimension_numbers<[1], [1], [0], [0], [0, 0, 1, 0], [], []>} : vector<16x8xf32>, vector<16x8xf32>, vector<16x16xf32> -> vector<16x16xf32>
    %78 = arith.addf %77, %1 : vector<16x16xf32>
    %79 = math.exp %78 : vector<16x16xf32>
    %cst_29 = arith.constant dense<0.000000e+00> : vector<16xf32>
    %80 = vector.multi_reduction <add>, %79, %cst_29 [1] : vector<16x16xf32> to vector<16xf32>
    %81 = vector.shape_cast %80 : vector<16xf32> to vector<16x1xf32>
    %82 = tpu.reciprocal %81 {approx = true} : vector<16x1xf32> -> vector<16x1xf32>
    %83 = vector.broadcast %82 : vector<16x1xf32> to vector<16x16xf32>
    %84 = arith.mulf %79, %83 : vector<16x16xf32>
    %cst_30 = arith.constant dense<0.000000e+00> : vector<16x32xf32>
    %85 = tpu.matmul %84, %76, %cst_30 {dimension_numbers = #tpu.dot_dimension_numbers<[1], [0], [0], [1], [0, 0, 1, 1], [], []>} : vector<16x16xf32>, vector<16x32xf32>, vector<16x32xf32> -> vector<16x32xf32>
    %86 = arith.addf %73, %85 : vector<16x32xf32>
    %87 = arith.addf %0, %86 : vector<16x32xf32>
    %88 = vector.broadcast %8 : vector<1x32xf32> to vector<16x32xf32>
    %89 = arith.addf %87, %88 : vector<16x32xf32>
    %cst_31 = arith.constant dense<0.000000e+00> : vector<16x64xf32>
    %90 = tpu.matmul %89, %2, %cst_31 {dimension_numbers = #tpu.dot_dimension_numbers<[1], [0], [0], [1], [0, 0, 1, 1], [], []>} : vector<16x32xf32>, vector<32x64xf32>, vector<16x64xf32> -> vector<16x64xf32>
    %91 = vector.broadcast %3 : vector<1x64xf32> to vector<16x64xf32>
    %92 = arith.addf %90, %91 : vector<16x64xf32>
    %cst_32 = arith.constant 0.000000e+00 : f32
    %93 = vector.broadcast %cst_32 : f32 to vector<16x64xf32>
    %94 = arith.maximumf %92, %93 : vector<16x64xf32>
    %cst_33 = arith.constant dense<0.000000e+00> : vector<16x32xf32>
    %95 = tpu.matmul %94, %4, %cst_33 {dimension_numbers = #tpu.dot_dimension_numbers<[1], [0], [0], [1], [0, 0, 1, 1], [], []>} : vector<16x64xf32>, vector<64x32xf32>, vector<16x32xf32> -> vector<16x32xf32>
    %96 = vector.broadcast %5 : vector<1x32xf32> to vector<16x32xf32>
    %97 = arith.addf %95, %96 : vector<16x32xf32>
    %c32_34 = arith.constant 32 : index
    %c0_35 = arith.constant 0 : index
    %98 = vector.load %arg0[%c32_34, %c0_35] : memref<137x32xf32, #tpu.memory_space<vmem>>, vector<16x32xf32>
    %99 = arith.addf %89, %97 : vector<16x32xf32>
    %100 = arith.addf %99, %98 : vector<16x32xf32>
    %c129 = arith.constant 129 : index
    %c0_36 = arith.constant 0 : index
    %101 = vector.load %arg0[%c129, %c0_36] : memref<137x32xf32, #tpu.memory_space<vmem>>, vector<1x32xf32>
    %c131 = arith.constant 131 : index
    %c0_37 = arith.constant 0 : index
    %102 = vector.load %arg0[%c131, %c0_37] : memref<137x32xf32, #tpu.memory_space<vmem>>, vector<1x32xf32>
    %c133 = arith.constant 133 : index
    %c0_38 = arith.constant 0 : index
    %103 = vector.load %arg0[%c133, %c0_38] : memref<137x32xf32, #tpu.memory_space<vmem>>, vector<1x32xf32>
    %cst_39 = arith.constant dense<0.000000e+00> : vector<16xf32>
    %104 = vector.multi_reduction <add>, %100, %cst_39 [1] : vector<16x32xf32> to vector<16xf32>
    %105 = vector.shape_cast %104 : vector<16xf32> to vector<16x1xf32>
    %cst_40 = arith.constant 3.200000e+01 : f32
    %106 = vector.broadcast %cst_40 : f32 to vector<16x1xf32>
    %107 = arith.divf %105, %106 : vector<16x1xf32>
    %108 = vector.broadcast %107 : vector<16x1xf32> to vector<16x32xf32>
    %109 = arith.subf %100, %108 : vector<16x32xf32>
    %110 = arith.mulf %109, %109 : vector<16x32xf32>
    %cst_41 = arith.constant dense<0.000000e+00> : vector<16xf32>
    %111 = vector.multi_reduction <add>, %110, %cst_41 [1] : vector<16x32xf32> to vector<16xf32>
    %112 = vector.shape_cast %111 : vector<16xf32> to vector<16x1xf32>
    %cst_42 = arith.constant 3.200000e+01 : f32
    %113 = vector.broadcast %cst_42 : f32 to vector<16x1xf32>
    %114 = arith.divf %112, %113 : vector<16x1xf32>
    %115 = vector.broadcast %107 : vector<16x1xf32> to vector<16x32xf32>
    %116 = arith.subf %100, %115 : vector<16x32xf32>
    %cst_43 = arith.constant 9.99999974E-6 : f32
    %117 = vector.broadcast %cst_43 : f32 to vector<16x1xf32>
    %118 = arith.addf %114, %117 : vector<16x1xf32>
    %119 = math.rsqrt %118 : vector<16x1xf32>
    %120 = vector.broadcast %119 : vector<16x1xf32> to vector<16x32xf32>
    %121 = arith.mulf %116, %120 : vector<16x32xf32>
    %122 = vector.broadcast %101 : vector<1x32xf32> to vector<16x32xf32>
    %123 = arith.mulf %121, %122 : vector<16x32xf32>
    %124 = vector.broadcast %102 : vector<1x32xf32> to vector<16x32xf32>
    %125 = arith.addf %123, %124 : vector<16x32xf32>
    %c32_44 = arith.constant 32 : index
    %c0_45 = arith.constant 0 : index
    %126 = vector.load %arg1[%c32_44, %c0_45] : memref<66x192xf32, #tpu.memory_space<vmem>>, vector<32x192xf32>
    %c65 = arith.constant 65 : index
    %c0_46 = arith.constant 0 : index
    %127 = vector.load %arg1[%c65, %c0_46] : memref<66x192xf32, #tpu.memory_space<vmem>>, vector<1x192xf32>
    %cst_47 = arith.constant dense<0.000000e+00> : vector<16x192xf32>
    %128 = tpu.matmul %125, %126, %cst_47 {dimension_numbers = #tpu.dot_dimension_numbers<[1], [0], [0], [1], [0, 0, 1, 1], [], []>} : vector<16x32xf32>, vector<32x192xf32>, vector<16x192xf32> -> vector<16x192xf32>
    %129 = vector.broadcast %127 : vector<1x192xf32> to vector<16x192xf32>
    %130 = arith.addf %128, %129 : vector<16x192xf32>
    %131 = vector.extract_strided_slice %130 {offsets = [0, 0], sizes = [16, 8], strides = [1, 1]} : vector<16x192xf32> to vector<16x8xf32>
    %132 = vector.extract_strided_slice %130 {offsets = [0, 32], sizes = [16, 8], strides = [1, 1]} : vector<16x192xf32> to vector<16x8xf32>
    %133 = vector.extract_strided_slice %130 {offsets = [0, 64], sizes = [16, 32], strides = [1, 1]} : vector<16x192xf32> to vector<16x32xf32>
    %cst_48 = arith.constant dense<0.000000e+00> : vector<16x16xf32>
    %134 = tpu.matmul %131, %132, %cst_48 {dimension_numbers = #tpu.dot_dimension_numbers<[1], [1], [0], [0], [0, 0, 1, 0], [], []>} : vector<16x8xf32>, vector<16x8xf32>, vector<16x16xf32> -> vector<16x16xf32>
    %135 = arith.addf %134, %1 : vector<16x16xf32>
    %136 = math.exp %135 : vector<16x16xf32>
    %cst_49 = arith.constant dense<0.000000e+00> : vector<16xf32>
    %137 = vector.multi_reduction <add>, %136, %cst_49 [1] : vector<16x16xf32> to vector<16xf32>
    %138 = vector.shape_cast %137 : vector<16xf32> to vector<16x1xf32>
    %139 = tpu.reciprocal %138 {approx = true} : vector<16x1xf32> -> vector<16x1xf32>
    %140 = vector.broadcast %139 : vector<16x1xf32> to vector<16x16xf32>
    %141 = arith.mulf %136, %140 : vector<16x16xf32>
    %cst_50 = arith.constant dense<0.000000e+00> : vector<16x32xf32>
    %142 = tpu.matmul %141, %133, %cst_50 {dimension_numbers = #tpu.dot_dimension_numbers<[1], [0], [0], [1], [0, 0, 1, 1], [], []>} : vector<16x16xf32>, vector<16x32xf32>, vector<16x32xf32> -> vector<16x32xf32>
    %143 = vector.extract_strided_slice %130 {offsets = [0, 8], sizes = [16, 8], strides = [1, 1]} : vector<16x192xf32> to vector<16x8xf32>
    %144 = vector.extract_strided_slice %130 {offsets = [0, 40], sizes = [16, 8], strides = [1, 1]} : vector<16x192xf32> to vector<16x8xf32>
    %145 = vector.extract_strided_slice %130 {offsets = [0, 96], sizes = [16, 32], strides = [1, 1]} : vector<16x192xf32> to vector<16x32xf32>
    %cst_51 = arith.constant dense<0.000000e+00> : vector<16x16xf32>
    %146 = tpu.matmul %143, %144, %cst_51 {dimension_numbers = #tpu.dot_dimension_numbers<[1], [1], [0], [0], [0, 0, 1, 0], [], []>} : vector<16x8xf32>, vector<16x8xf32>, vector<16x16xf32> -> vector<16x16xf32>
    %147 = arith.addf %146, %1 : vector<16x16xf32>
    %148 = math.exp %147 : vector<16x16xf32>
    %cst_52 = arith.constant dense<0.000000e+00> : vector<16xf32>
    %149 = vector.multi_reduction <add>, %148, %cst_52 [1] : vector<16x16xf32> to vector<16xf32>
    %150 = vector.shape_cast %149 : vector<16xf32> to vector<16x1xf32>
    %151 = tpu.reciprocal %150 {approx = true} : vector<16x1xf32> -> vector<16x1xf32>
    %152 = vector.broadcast %151 : vector<16x1xf32> to vector<16x16xf32>
    %153 = arith.mulf %148, %152 : vector<16x16xf32>
    %cst_53 = arith.constant dense<0.000000e+00> : vector<16x32xf32>
    %154 = tpu.matmul %153, %145, %cst_53 {dimension_numbers = #tpu.dot_dimension_numbers<[1], [0], [0], [1], [0, 0, 1, 1], [], []>} : vector<16x16xf32>, vector<16x32xf32>, vector<16x32xf32> -> vector<16x32xf32>
    %155 = arith.addf %142, %154 : vector<16x32xf32>
    %156 = vector.extract_strided_slice %130 {offsets = [0, 16], sizes = [16, 8], strides = [1, 1]} : vector<16x192xf32> to vector<16x8xf32>
    %157 = vector.extract_strided_slice %130 {offsets = [0, 48], sizes = [16, 8], strides = [1, 1]} : vector<16x192xf32> to vector<16x8xf32>
    %158 = vector.extract_strided_slice %130 {offsets = [0, 128], sizes = [16, 32], strides = [1, 1]} : vector<16x192xf32> to vector<16x32xf32>
    %cst_54 = arith.constant dense<0.000000e+00> : vector<16x16xf32>
    %159 = tpu.matmul %156, %157, %cst_54 {dimension_numbers = #tpu.dot_dimension_numbers<[1], [1], [0], [0], [0, 0, 1, 0], [], []>} : vector<16x8xf32>, vector<16x8xf32>, vector<16x16xf32> -> vector<16x16xf32>
    %160 = arith.addf %159, %1 : vector<16x16xf32>
    %161 = math.exp %160 : vector<16x16xf32>
    %cst_55 = arith.constant dense<0.000000e+00> : vector<16xf32>
    %162 = vector.multi_reduction <add>, %161, %cst_55 [1] : vector<16x16xf32> to vector<16xf32>
    %163 = vector.shape_cast %162 : vector<16xf32> to vector<16x1xf32>
    %164 = tpu.reciprocal %163 {approx = true} : vector<16x1xf32> -> vector<16x1xf32>
    %165 = vector.broadcast %164 : vector<16x1xf32> to vector<16x16xf32>
    %166 = arith.mulf %161, %165 : vector<16x16xf32>
    %cst_56 = arith.constant dense<0.000000e+00> : vector<16x32xf32>
    %167 = tpu.matmul %166, %158, %cst_56 {dimension_numbers = #tpu.dot_dimension_numbers<[1], [0], [0], [1], [0, 0, 1, 1], [], []>} : vector<16x16xf32>, vector<16x32xf32>, vector<16x32xf32> -> vector<16x32xf32>
    %168 = arith.addf %155, %167 : vector<16x32xf32>
    %169 = vector.extract_strided_slice %130 {offsets = [0, 24], sizes = [16, 8], strides = [1, 1]} : vector<16x192xf32> to vector<16x8xf32>
    %170 = vector.extract_strided_slice %130 {offsets = [0, 56], sizes = [16, 8], strides = [1, 1]} : vector<16x192xf32> to vector<16x8xf32>
    %171 = vector.extract_strided_slice %130 {offsets = [0, 160], sizes = [16, 32], strides = [1, 1]} : vector<16x192xf32> to vector<16x32xf32>
    %cst_57 = arith.constant dense<0.000000e+00> : vector<16x16xf32>
    %172 = tpu.matmul %169, %170, %cst_57 {dimension_numbers = #tpu.dot_dimension_numbers<[1], [1], [0], [0], [0, 0, 1, 0], [], []>} : vector<16x8xf32>, vector<16x8xf32>, vector<16x16xf32> -> vector<16x16xf32>
    %173 = arith.addf %172, %1 : vector<16x16xf32>
    %174 = math.exp %173 : vector<16x16xf32>
    %cst_58 = arith.constant dense<0.000000e+00> : vector<16xf32>
    %175 = vector.multi_reduction <add>, %174, %cst_58 [1] : vector<16x16xf32> to vector<16xf32>
    %176 = vector.shape_cast %175 : vector<16xf32> to vector<16x1xf32>
    %177 = tpu.reciprocal %176 {approx = true} : vector<16x1xf32> -> vector<16x1xf32>
    %178 = vector.broadcast %177 : vector<16x1xf32> to vector<16x16xf32>
    %179 = arith.mulf %174, %178 : vector<16x16xf32>
    %cst_59 = arith.constant dense<0.000000e+00> : vector<16x32xf32>
    %180 = tpu.matmul %179, %171, %cst_59 {dimension_numbers = #tpu.dot_dimension_numbers<[1], [0], [0], [1], [0, 0, 1, 1], [], []>} : vector<16x16xf32>, vector<16x32xf32>, vector<16x32xf32> -> vector<16x32xf32>
    %181 = arith.addf %168, %180 : vector<16x32xf32>
    %182 = arith.addf %100, %181 : vector<16x32xf32>
    %183 = vector.broadcast %103 : vector<1x32xf32> to vector<16x32xf32>
    %184 = arith.addf %182, %183 : vector<16x32xf32>
    %cst_60 = arith.constant dense<0.000000e+00> : vector<16x64xf32>
    %185 = tpu.matmul %184, %2, %cst_60 {dimension_numbers = #tpu.dot_dimension_numbers<[1], [0], [0], [1], [0, 0, 1, 1], [], []>} : vector<16x32xf32>, vector<32x64xf32>, vector<16x64xf32> -> vector<16x64xf32>
    %186 = vector.broadcast %3 : vector<1x64xf32> to vector<16x64xf32>
    %187 = arith.addf %185, %186 : vector<16x64xf32>
    %cst_61 = arith.constant 0.000000e+00 : f32
    %188 = vector.broadcast %cst_61 : f32 to vector<16x64xf32>
    %189 = arith.maximumf %187, %188 : vector<16x64xf32>
    %cst_62 = arith.constant dense<0.000000e+00> : vector<16x32xf32>
    %190 = tpu.matmul %189, %4, %cst_62 {dimension_numbers = #tpu.dot_dimension_numbers<[1], [0], [0], [1], [0, 0, 1, 1], [], []>} : vector<16x64xf32>, vector<64x32xf32>, vector<16x32xf32> -> vector<16x32xf32>
    %191 = vector.broadcast %5 : vector<1x32xf32> to vector<16x32xf32>
    %192 = arith.addf %190, %191 : vector<16x32xf32>
    %c48 = arith.constant 48 : index
    %c0_63 = arith.constant 0 : index
    %193 = vector.load %arg0[%c48, %c0_63] : memref<137x32xf32, #tpu.memory_space<vmem>>, vector<16x32xf32>
    %194 = arith.addf %184, %192 : vector<16x32xf32>
    %195 = arith.addf %194, %193 : vector<16x32xf32>
    %cst_64 = arith.constant dense<0.000000e+00> : vector<16xf32>
    %196 = vector.multi_reduction <add>, %195, %cst_64 [1] : vector<16x32xf32> to vector<16xf32>
    %197 = vector.shape_cast %196 : vector<16xf32> to vector<16x1xf32>
    %cst_65 = arith.constant 3.200000e+01 : f32
    %198 = vector.broadcast %cst_65 : f32 to vector<16x1xf32>
    %199 = arith.divf %197, %198 : vector<16x1xf32>
    %200 = vector.broadcast %199 : vector<16x1xf32> to vector<16x32xf32>
    %201 = arith.subf %195, %200 : vector<16x32xf32>
    %202 = arith.mulf %201, %201 : vector<16x32xf32>
    %cst_66 = arith.constant dense<0.000000e+00> : vector<16xf32>
    %203 = vector.multi_reduction <add>, %202, %cst_66 [1] : vector<16x32xf32> to vector<16xf32>
    %204 = vector.shape_cast %203 : vector<16xf32> to vector<16x1xf32>
    %cst_67 = arith.constant 3.200000e+01 : f32
    %205 = vector.broadcast %cst_67 : f32 to vector<16x1xf32>
    %206 = arith.divf %204, %205 : vector<16x1xf32>
    %207 = vector.broadcast %199 : vector<16x1xf32> to vector<16x32xf32>
    %208 = arith.subf %195, %207 : vector<16x32xf32>
    %cst_68 = arith.constant 9.99999974E-6 : f32
    %209 = vector.broadcast %cst_68 : f32 to vector<16x1xf32>
    %210 = arith.addf %206, %209 : vector<16x1xf32>
    %211 = math.rsqrt %210 : vector<16x1xf32>
    %212 = vector.broadcast %211 : vector<16x1xf32> to vector<16x32xf32>
    %213 = arith.mulf %208, %212 : vector<16x32xf32>
    %c135 = arith.constant 135 : index
    %c0_69 = arith.constant 0 : index
    %214 = vector.load %arg0[%c135, %c0_69] : memref<137x32xf32, #tpu.memory_space<vmem>>, vector<1x32xf32>
    %215 = vector.broadcast %214 : vector<1x32xf32> to vector<16x32xf32>
    %216 = arith.mulf %213, %215 : vector<16x32xf32>
    %c136 = arith.constant 136 : index
    %c0_70 = arith.constant 0 : index
    %217 = vector.load %arg0[%c136, %c0_70] : memref<137x32xf32, #tpu.memory_space<vmem>>, vector<1x32xf32>
    %218 = vector.broadcast %217 : vector<1x32xf32> to vector<16x32xf32>
    %219 = arith.addf %216, %218 : vector<16x32xf32>
    %c0_71 = arith.constant 0 : index
    %c0_72 = arith.constant 0 : index
    %220 = vector.load %arg3[%c0_71, %c0_72] : memref<33x128xf32, #tpu.memory_space<vmem>>, vector<32x128xf32>
    %cst_73 = arith.constant dense<0.000000e+00> : vector<16x128xf32>
    %221 = tpu.matmul %219, %220, %cst_73 {dimension_numbers = #tpu.dot_dimension_numbers<[1], [0], [0], [1], [0, 0, 1, 1], [], []>} : vector<16x32xf32>, vector<32x128xf32>, vector<16x128xf32> -> vector<16x128xf32>
    %c32_74 = arith.constant 32 : index
    %c0_75 = arith.constant 0 : index
    %222 = vector.load %arg3[%c32_74, %c0_75] : memref<33x128xf32, #tpu.memory_space<vmem>>, vector<1x128xf32>
    %223 = vector.broadcast %222 : vector<1x128xf32> to vector<16x128xf32>
    %224 = arith.addf %221, %223 : vector<16x128xf32>
    %c0_76 = arith.constant 0 : index
    %c0_77 = arith.constant 0 : index
    %225 = vector.load %arg4[%c0_76, %c0_77] : memref<16x128xf32, #tpu.memory_space<vmem>>, vector<16x128xf32>
    tpu.vector_store %arg4[%c0_76, %c0_77], %224 {strides = array<i32>} : memref<16x128xf32, #tpu.memory_space<vmem>>, vector<16x128xf32>,
    return
  }
}

</mosaic_0001>

<llo_original>
// kernel: tpu_custom_call.1
$region0: #{tpu_custom_call.1}
  #allocation0 [shape = 'u32[]', space=smem, size = 0x4, offset = 0x4, fixed_abs, tag = 'smem constant byte address 0x4 - core index']
  #allocation1 [shape = 'u32[144,128]{1,0:T(1,128)}', space=vmem, size = 0x12000, scoped, tag = 'internal scratch']
  %s0 = inlined_call_operand.vmem [shape: f32[137,32], index: 0, kind: input, shape index: {}]
  %s1 = inlined_call_operand.vmem [shape: f32[66,192], index: 1, kind: input, shape index: {}]
  %s2 = inlined_call_operand.vmem [shape: f32[33,64], index: 2, kind: input, shape index: {}]
  %s3 = inlined_call_operand.hbm [shape: f32[33,128], index: 3, kind: input, shape index: {}]
  %s4 = inlined_call_operand.hbm [shape: f32[16,128], index: 4, kind: output, shape index: {}]
  %s5 = sld [smem:[#allocation0]]
  $region30: #{tpu_custom_call.1} parent=0
    _
  %s7 = ssub.s32 1, %s5
  %s8 = scalar_select 0, %s7, %s5
  $region1: #{tpu_custom_call.1} parent=0
    #allocation2 [shape = 'u8[20480]{0}', space=vmem, size = 0x5000, scoped, tag = 'input window, operand 3, single buffered']
    #allocation3 [shape = 's32[1]{0}', space=sflag, size = 0x4, scoped, tag = 'scoped memory for tpu_custom_call.1']
    #allocation4 [shape = 's32[1]{0}', space=sflag, size = 0x4, scoped, tag = 'scoped memory for tpu_custom_call.1']
    #allocation5 [shape = 'u8[8192]{0}', space=vmem, size = 0x2000, scoped, tag = 'output window, operand 0, single buffered']
    %9 = vsyncpa [#allocation3], 0
    %10 = vsyncpa [#allocation4], 0
    // Predicated region
    $region2: #{tpu_custom_call.1} parent=1 // pred_check
      _
    $region3: #{tpu_custom_call.1} parent=1 // pred_check_branch
      %12 = sbr.rel (0) target = $region5
    $region4: #{tpu_custom_call.1} parent=1 // pred_region
      _
    $region5: #{tpu_custom_call.1} parent=1 // pred_fallthru
      _
    // Predicated region
    $region6: #{tpu_custom_call.1} parent=1 // pred_check
      _
    $region7: #{tpu_custom_call.1} parent=1 // pred_check_branch
      %14 = sbr.rel (0) target = $region9
    $region8: #{tpu_custom_call.1} parent=1 // pred_region
      _
    $region9: #{tpu_custom_call.1} parent=1 // pred_fallthru
      _
    // Predicated region
    $region10: #{tpu_custom_call.1} parent=1 // pred_check
      _
    $region11: #{tpu_custom_call.1} parent=1 // pred_check_branch
      %16 = sbr.rel (0) target = $region13
    $region12: #{tpu_custom_call.1} parent=1 // pred_region
      _
    $region13: #{tpu_custom_call.1} parent=1 // pred_fallthru
      _
    // Predicated region
    $region14: #{tpu_custom_call.1} parent=1 // pred_check
      _
    $region15: #{tpu_custom_call.1} parent=1 // pred_check_branch
      %18 = sbr.rel (0) target = $region17
    $region16: #{tpu_custom_call.1} parent=1 // pred_region
      %s20 = ssub.s32 640, 640
      %21 = vsyncadd [#allocation3], %s20
      %s22 = sshll.u32 [#allocation2], 4
      %s23 = int_to_ptr.vmem [resolvable:$true] %s22
      %28 = dma.hbm_to_vmem [thread:$0]  %s3, 640, %s23, [#allocation3], 128, 128, 8
    $region17: #{tpu_custom_call.1} parent=1 // pred_fallthru
      _
    // Predicated region
    $region18: #{tpu_custom_call.1} parent=1 // pred_check
      _
    $region19: #{tpu_custom_call.1} parent=1 // pred_check_branch
      %30 = sbr.rel (0) target = $region21
    $region20: #{tpu_custom_call.1} parent=1 // pred_region
      %31 = dma.done [#allocation3], 640
    $region21: #{tpu_custom_call.1} parent=1 // pred_fallthru
      _
    %v32 = vld [vmem:[%s0] sm:$0xff]
    %v33 = vld [vmem:[%s0 + $0x8] sm:$0xff]
    %v34 = vld [vmem:[%s0 + $0x10] sm:$0xff]
    %v35 = vld [vmem:[%s0 + $0x18] sm:$0xff]
    %v36 = vld [vmem:[%s2] sm:$0xff]
    %v37 = vld [vmem:[%s2 + $0x8] sm:$0xff]
    %v38 = vld [vmem:[%s2 + $0x10] sm:$0xff]
    %v39 = vld [vmem:[%s2 + $0x18] sm:$0xff]
    %v40 = vld [vmem:[%s2 + $0x20] sm:$0x1]
    %v41 = vld [vmem:[%s0 + $0x40] sm:$0xff]
    %v42 = vld [vmem:[%s0 + $0x48] sm:$0xff]
    %v43 = vld [vmem:[%s0 + $0x50] sm:$0xff]
    %v44 = vld [vmem:[%s0 + $0x58] sm:$0xff]
    %v45 = vld [vmem:[%s0 + $0x60] sm:$0xff]
    %v46 = vld [vmem:[%s0 + $0x68] sm:$0xff]
    %v47 = vld [vmem:[%s0 + $0x70] sm:$0xff]
    %v48 = vld [vmem:[%s0 + $0x78] sm:$0xff]
    %v49 = vld [vmem:[%s0 + $0x86] sm:$0x1]
    %v50 = vld [vmem:[%s0 + $0x80] sm:$0x1]
    %v51 = vld [vmem:[%s0 + $0x82] sm:$0x1]
    %v52 = vld [vmem:[%s0 + $0x84] sm:$0x1]
    %vm53 = vcmask 261120
    %v54 = vsel %vm53, %v32, 0.0
    %55 = vadd.xlane.f32.xlu0 %v54
    %v56 = vpop.xlane.xlu0 %55
    %v57 = vsel %vm53, %v33, 0.0
    %58 = vadd.xlane.f32.xlu0 %v57
    %v59 = vpop.xlane.xlu0 %58
    %v60 = vrcp.pop 32.0
    %v61 = vmul.f32 %v56, %v60
    %v62 = vmul.f32 %v59, %v60
    %v63 = vsub.f32 %v32, %v61
    %v64 = vsub.f32 %v33, %v62
    %v65 = vmul.f32 %v63, %v63
    %v66 = vmul.f32 %v64, %v64
    %v67 = vsel %vm53, %v65, 0.0
    %68 = vadd.xlane.f32.xlu0 %v67
    %v69 = vpop.xlane.xlu0 %68
    %v70 = vsel %vm53, %v66, 0.0
    %71 = vadd.xlane.f32.xlu0 %v70
    %v72 = vpop.xlane.xlu0 %71
    %v73 = vmul.f32 %v69, %v60
    %v74 = vmul.f32 %v72, %v60
    %v75 = vadd.f32 %v73, 1e-05
    %v76 = vadd.f32 %v74, 1e-05
    %v77 = vrsqrt.pop %v75
    %v78 = vrsqrt.pop %v76
    %v79 = vmul.f32 %v63, %v77
    %v80 = vmul.f32 %v64, %v78
    %v81 = vlaneseq
    %v82 = vshrl.u32 %v81, 7
    %v83 = vsub.s32 0, %v82
    %v84 = vrot.slane %v50, %v83
    %v85 = vmul.f32 %v79, %v84
    %v86 = vmul.f32 %v80, %v84
    %v87 = vlaneseq
    %v88 = vshrl.u32 %v87, 7
    %v89 = vsub.s32 0, %v88
    %v90 = vrot.slane %v51, %v89
    %v91 = vadd.f32 %v85, %v90
    %v92 = vadd.f32 %v86, %v90
    %v93 = vld [vmem:[%s1] sm:$0xff]
    %v94 = vld [vmem:[%s1 + $0x8] sm:$0xff]
    %v95 = vld [vmem:[%s1 + $0x10] sm:$0xff]
    %v96 = vld [vmem:[%s1 + $0x18] sm:$0xff]
    %v97 = vld [vmem:[%s1 + $0x20] sm:$0xff]
    %v98 = vld [vmem:[%s1 + $0x28] sm:$0xff]
    %v99 = vld [vmem:[%s1 + $0x30] sm:$0xff]
    %v100 = vld [vmem:[%s1 + $0x38] sm:$0xff]
    %s101 = scalar_lea.vmem %s1, 128
    %v102 = vld [vmem:[%s101] ss:$8 sm:$0x3]
    %v104 = vlaneseq
    %v105 = vshrl.u32 %v104, 7
    %v106 = vsub.s32 0, %v105
    %v107 = vrot.slane %v102, %v106
    %v108 = vlaneseq
    %v109 = vshrl.u32 %v108, 7
    %v110 = vsub.s32 1, %v109
    %v111 = vrot.slane %v102, %v110
    %v115 = vsel %vm53, %v91, 0
    %v118 = vsel %vm53, %v92, 0
    %120 = vmatprep.subr.mxu0 %v94
    %121 = vmatpush1.msra.mxu0 %v93
    %122 = vmatprep.subr.mxu0 %v96
    %123 = vmatpush1.msra.mxu0 %v95
    %124 = vmatprep.subr.mxu0 %v98
    %125 = vmatpush1.msra.mxu0 %v97
    %126 = vmatprep.subr.mxu0 %v100
    %127 = vmatpush1.msra.mxu0 %v99
    %128 = vmatprep.subr.mxu0 0.0
    %129 = vmatpush1.msra.mxu0 0.0
    %130 = vmatprep.subr.mxu0 0.0
    %131 = vmatpush1.msra.mxu0 0.0
    %132 = vmatprep.subr.mxu0 0.0
    %133 = vmatpush1.msra.mxu0 0.0
    %134 = vmatprep.subr.mxu0 0.0
    %135 = vmatpush1.msra.mxu0 0.0
    %136 = vmatprep.subr.mxu0 0.0
    %137 = vmatpush1.msra.mxu0 0.0
    %138 = vmatprep.subr.mxu0 0.0
    %139 = vmatpush1.msra.mxu0 0.0
    %140 = vmatprep.subr.mxu0 0.0
    %141 = vmatpush1.msra.mxu0 0.0
    %142 = vmatprep.subr.mxu0 0.0
    %143 = vmatpush1.msra.mxu0 0.0
    %144 = vmatprep.subr.mxu0 0.0
    %145 = vmatpush1.msra.mxu0 0.0
    %146 = vmatprep.subr.mxu0 0.0
    %147 = vmatpush1.msra.mxu0 0.0
    %148 = vmatprep.subr.mxu0 0.0
    %149 = vmatpush1.msra.mxu0 0.0
    %150 = vmatprep.subr.mxu0 0.0
    %151 = vmatpush1.msra.mxu0 0.0
    %152 = vmatprep.subr.mxu0 0.0
    %153 = vmatpush1.msra.mxu0 0.0
    %154 = vmatprep.subr.mxu0 0.0
    %155 = vmatpush1.msra.mxu0 0.0
    %156 = vmatprep.subr.mxu0 0.0
    %157 = vmatpush1.msra.mxu0 0.0
    %158 = vmatprep.subr.mxu0 0.0
    %159 = vmatpush1.msra.mxu0 0.0
    %160 = vmatprep.subr.mxu0 0.0
    %161 = vmatpush1.msra.mxu0 0.0
    %162 = vmatprep.subr.mxu0 0.0
    %163 = vmatpush1.msra.mxu0 0.0
    %164 = vmatprep.subr.mxu0 0.0
    %165 = vmatpush1.msra.mxu0 0.0
    %166 = vmatprep.subr.mxu0 0.0
    %167 = vmatpush1.msra.mxu0 0.0
    %168 = vmatprep.subr.mxu0 0.0
    %169 = vmatpush1.msra.mxu0 0.0
    %170 = vmatprep.subr.mxu0 0.0
    %171 = vmatpush1.msra.mxu0 0.0
    %172 = vmatprep.subr.mxu0 0.0
    %173 = vmatpush1.msra.mxu0 0.0
    %174 = vmatprep.subr.mxu0 0.0
    %175 = vmatpush1.msra.mxu0 0.0
    %176 = vmatprep.subr.mxu0 0.0
    %177 = vmatpush1.msra.mxu0 0.0
    %178 = vmatprep.subr.mxu0 0.0
    %179 = vmatpush1.msra.mxu0 0.0
    %180 = vmatprep.subr.mxu0 0.0
    %181 = vmatpush1.msra.mxu0 0.0
    %182 = vmatprep.subr.mxu0 0.0
    %183 = vmatpush1.msra.mxu0 0.0
    %184 = vmatprep.mubr.f32.mxu0 0.0
    %185 = vmatmul.mubr.f32.gmra.mrb[0].mxu0 %v115
    %v186 = vpop.f32.mrb[0].mxu0
    %v187 = vadd.f32 %v107, %v186
    %v188 = vpop.f32.mrb[0].mxu0
    %v189 = vadd.f32 %v111, %v188
    %190 = vmatprep.mubr.f32.mxu0 0.0
    %191 = vmatmul.mubr.f32.gmra.mrb[0].mxu0 %v118
    %v192 = vpop.f32.mrb[0].mxu0
    %v193 = vadd.f32 %v107, %v192
    %v194 = vpop.f32.mrb[0].mxu0
    %v195 = vadd.f32 %v111, %v194
    %196 = vdwg.mxu0
    %199 = vrot.lane.b32.xlu0 %v187, 96
    %v200 = vpop.permute.xlu0 %199
    %201 = vrot.lane.b32.xlu0 %v193, 96
    %v202 = vpop.permute.xlu0 %201
    %vm203 = vcmask 64512
    %v204 = vsel %vm203, %v187, 0
    %v206 = vsel %vm203, %v193, 0
    %v208 = vsel %vm203, %v200, 0
    %v210 = vsel %vm203, %v202, 0
    %212 = vmatprep.subr.mxu0 0.0
    %213 = vmatpush1.xpose.msra.mxu0 %v208
    %214 = vmatprep.subr.mxu0 0.0
    %215 = vmatpush1.xpose.msra.mxu0 %v210
    %216 = vmatprep.subr.mxu0 0.0
    %217 = vmatpush1.xpose.msra.mxu0 0.0
    %218 = vmatprep.subr.mxu0 0.0
    %219 = vmatpush1.xpose.msra.mxu0 0.0
    %220 = vmatprep.subr.mxu0 0.0
    %221 = vmatpush1.xpose.msra.mxu0 0.0
    %222 = vmatprep.subr.mxu0 0.0
    %223 = vmatpush1.xpose.msra.mxu0 0.0
    %224 = vmatprep.subr.mxu0 0.0
    %225 = vmatpush1.xpose.msra.mxu0 0.0
    %226 = vmatprep.subr.mxu0 0.0
    %227 = vmatpush1.xpose.msra.mxu0 0.0
    %228 = vmatprep.subr.mxu0 0.0
    %229 = vmatpush1.xpose.msra.mxu0 0.0
    %230 = vmatprep.subr.mxu0 0.0
    %231 = vmatpush1.xpose.msra.mxu0 0.0
    %232 = vmatprep.subr.mxu0 0.0
    %233 = vmatpush1.xpose.msra.mxu0 0.0
    %234 = vmatprep.subr.mxu0 0.0
    %235 = vmatpush1.xpose.msra.mxu0 0.0
    %236 = vmatprep.subr.mxu0 0.0
    %237 = vmatpush1.xpose.msra.mxu0 0.0
    %238 = vmatprep.subr.mxu0 0.0
    %239 = vmatpush1.xpose.msra.mxu0 0.0
    %240 = vmatprep.subr.mxu0 0.0
    %241 = vmatpush1.xpose.msra.mxu0 0.0
    %242 = vmatprep.subr.mxu0 0.0
    %243 = vmatpush1.xpose.msra.mxu0 0.0
    %244 = vmatprep.subr.mxu0 0.0
    %245 = vmatpush1.xpose.msra.mxu0 0.0
    %246 = vmatprep.subr.mxu0 0.0
    %247 = vmatpush1.xpose.msra.mxu0 0.0
    %248 = vmatprep.subr.mxu0 0.0
    %249 = vmatpush1.xpose.msra.mxu0 0.0
    %250 = vmatprep.subr.mxu0 0.0
    %251 = vmatpush1.xpose.msra.mxu0 0.0
    %252 = vmatprep.subr.mxu0 0.0
    %253 = vmatpush1.xpose.msra.mxu0 0.0
    %254 = vmatprep.subr.mxu0 0.0
    %255 = vmatpush1.xpose.msra.mxu0 0.0
    %256 = vmatprep.subr.mxu0 0.0
    %257 = vmatpush1.xpose.msra.mxu0 0.0
    %258 = vmatprep.subr.mxu0 0.0
    %259 = vmatpush1.xpose.msra.mxu0 0.0
    %260 = vmatprep.subr.mxu0 0.0
    %261 = vmatpush1.xpose.msra.mxu0 0.0
    %262 = vmatprep.subr.mxu0 0.0
    %263 = vmatpush1.xpose.msra.mxu0 0.0
    %264 = vmatprep.subr.mxu0 0.0
    %265 = vmatpush1.xpose.msra.mxu0 0.0
    %266 = vmatprep.subr.mxu0 0.0
    %267 = vmatpush1.xpose.msra.mxu0 0.0
    %268 = vmatprep.subr.mxu0 0.0
    %269 = vmatpush1.xpose.msra.mxu0 0.0
    %270 = vmatprep.subr.mxu0 0.0
    %271 = vmatpush1.xpose.msra.mxu0 0.0
    %272 = vmatprep.subr.mxu0 0.0
    %273 = vmatpush1.xpose.msra.mxu0 0.0
    %274 = vmatprep.subr.mxu0 0.0
    %275 = vmatpush1.xpose.msra.mxu0 0.0
    %276 = vmatprep.mubr.f32.mxu0 0.0
    %277 = vmatmul.mubr.f32.gmra.mrb[0].mxu0 %v204
    %v278 = vpop.f32.mrb[0].mxu0
    %v279 = vadd.f32 %v34, %v278
    %v280 = vpop.f32.mrb[0].mxu0
    %281 = vmatprep.mubr.f32.mxu0 0.0
    %282 = vmatmul.mubr.f32.gmra.mrb[0].mxu0 %v206
    %v283 = vpop.f32.mrb[0].mxu0
    %v284 = vadd.f32 %v35, %v283
    %v285 = vpop.f32.mrb[0].mxu0
    %286 = vdwg.mxu0
    %v287 = vmul.f32 %v279, 1.442695
    %v288 = vpow.pop %v287
    %v289 = vmul.f32 %v284, 1.442695
    %v290 = vpow.pop %v289
    %vm291 = vcmask 130048
    %v292 = vsel %vm291, %v288, 0.0
    %293 = vadd.xlane.f32.xlu0 %v292
    %v294 = vpop.xlane.xlu0 %293
    %v295 = vsel %vm291, %v290, 0.0
    %296 = vadd.xlane.f32.xlu0 %v295
    %v297 = vpop.xlane.xlu0 %296
    %v298 = vrcp.pop %v294
    %v299 = vrcp.pop %v297
    %v300 = vmul.f32 %v288, %v298
    %v301 = vmul.f32 %v290, %v299
    %302 = vrot.lane.b32.xlu0 %v187, 120
    %v303 = vpop.permute.xlu0 %302
    %304 = vrot.lane.b32.xlu0 %v193, 120
    %v305 = vpop.permute.xlu0 %304
    %306 = vrot.lane.b32.xlu0 %v187, 88
    %v307 = vpop.permute.xlu0 %306
    %308 = vrot.lane.b32.xlu0 %v193, 88
    %v309 = vpop.permute.xlu0 %308
    %v310 = vsel %vm203, %v303, 0
    %v312 = vsel %vm203, %v305, 0
    %v314 = vsel %vm203, %v307, 0
    %v316 = vsel %vm203, %v309, 0
    %318 = vmatprep.subr.mxu0 0.0
    %319 = vmatpush1.xpose.msra.mxu0 %v314
    %320 = vmatprep.subr.mxu0 0.0
    %321 = vmatpush1.xpose.msra.mxu0 %v316
    %322 = vmatprep.subr.mxu0 0.0
    %323 = vmatpush1.xpose.msra.mxu0 0.0
    %324 = vmatprep.subr.mxu0 0.0
    %325 = vmatpush1.xpose.msra.mxu0 0.0
    %326 = vmatprep.subr.mxu0 0.0
    %327 = vmatpush1.xpose.msra.mxu0 0.0
    %328 = vmatprep.subr.mxu0 0.0
    %329 = vmatpush1.xpose.msra.mxu0 0.0
    %330 = vmatprep.subr.mxu0 0.0
    %331 = vmatpush1.xpose.msra.mxu0 0.0
    %332 = vmatprep.subr.mxu0 0.0
    %333 = vmatpush1.xpose.msra.mxu0 0.0
    %334 = vmatprep.subr.mxu0 0.0
    %335 = vmatpush1.xpose.msra.mxu0 0.0
    %336 = vmatprep.subr.mxu0 0.0
    %337 = vmatpush1.xpose.msra.mxu0 0.0
    %338 = vmatprep.subr.mxu0 0.0
    %339 = vmatpush1.xpose.msra.mxu0 0.0
    %340 = vmatprep.subr.mxu0 0.0
    %341 = vmatpush1.xpose.msra.mxu0 0.0
    %342 = vmatprep.subr.mxu0 0.0
    %343 = vmatpush1.xpose.msra.mxu0 0.0
    %344 = vmatprep.subr.mxu0 0.0
    %345 = vmatpush1.xpose.msra.mxu0 0.0
    %346 = vmatprep.subr.mxu0 0.0
    %347 = vmatpush1.xpose.msra.mxu0 0.0
    %348 = vmatprep.subr.mxu0 0.0
    %349 = vmatpush1.xpose.msra.mxu0 0.0
    %350 = vmatprep.subr.mxu0 0.0
    %351 = vmatpush1.xpose.msra.mxu0 0.0
    %352 = vmatprep.subr.mxu0 0.0
    %353 = vmatpush1.xpose.msra.mxu0 0.0
    %354 = vmatprep.subr.mxu0 0.0
    %355 = vmatpush1.xpose.msra.mxu0 0.0
    %356 = vmatprep.subr.mxu0 0.0
    %357 = vmatpush1.xpose.msra.mxu0 0.0
    %358 = vmatprep.subr.mxu0 0.0
    %359 = vmatpush1.xpose.msra.mxu0 0.0
    %360 = vmatprep.subr.mxu0 0.0
    %361 = vmatpush1.xpose.msra.mxu0 0.0
    %362 = vmatprep.subr.mxu0 0.0
    %363 = vmatpush1.xpose.msra.mxu0 0.0
    %364 = vmatprep.subr.mxu0 0.0
    %365 = vmatpush1.xpose.msra.mxu0 0.0
    %366 = vmatprep.subr.mxu0 0.0
    %367 = vmatpush1.xpose.msra.mxu0 0.0
    %368 = vmatprep.subr.mxu0 0.0
    %369 = vmatpush1.xpose.msra.mxu0 0.0
    %370 = vmatprep.subr.mxu0 0.0
    %371 = vmatpush1.xpose.msra.mxu0 0.0
    %372 = vmatprep.subr.mxu0 0.0
    %373 = vmatpush1.xpose.msra.mxu0 0.0
    %374 = vmatprep.subr.mxu0 0.0
    %375 = vmatpush1.xpose.msra.mxu0 0.0
    %376 = vmatprep.subr.mxu0 0.0
    %377 = vmatpush1.xpose.msra.mxu0 0.0
    %378 = vmatprep.subr.mxu0 0.0
    %379 = vmatpush1.xpose.msra.mxu0 0.0
    %380 = vmatprep.subr.mxu0 0.0
    %381 = vmatpush1.xpose.msra.mxu0 0.0
    %382 = vmatprep.mubr.f32.mxu0 0.0
    %383 = vmatmul.mubr.f32.gmra.mrb[0].mxu0 %v310
    %v384 = vpop.f32.mrb[0].mxu0
    %v385 = vadd.f32 %v34, %v384
    %v386 = vpop.f32.mrb[0].mxu0
    %387 = vmatprep.mubr.f32.mxu0 0.0
    %388 = vmatmul.mubr.f32.gmra.mrb[0].mxu0 %v312
    %v389 = vpop.f32.mrb[0].mxu0
    %v390 = vadd.f32 %v35, %v389
    %v391 = vpop.f32.mrb[0].mxu0
    %392 = vdwg.mxu0
    %v393 = vmul.f32 %v385, 1.442695
    %v394 = vpow.pop %v393
    %v395 = vmul.f32 %v390, 1.442695
    %v396 = vpow.pop %v395
    %v397 = vsel %vm291, %v394, 0.0
    %398 = vadd.xlane.f32.xlu0 %v397
    %v399 = vpop.xlane.xlu0 %398
    %v400 = vsel %vm291, %v396, 0.0
    %401 = vadd.xlane.f32.xlu0 %v400
    %v402 = vpop.xlane.xlu0 %401
    %v403 = vrcp.pop %v399
    %v404 = vrcp.pop %v402
    %v405 = vmul.f32 %v394, %v403
    %v406 = vmul.f32 %v396, %v404
    %407 = vrot.lane.b32.xlu0 %v187, 32
    %v408 = vpop.permute.xlu0 %407
    %409 = vrot.lane.b32.xlu0 %v193, 32
    %v410 = vpop.permute.xlu0 %409
    %v414 = vsel %vm291, %v405, 0
    %v417 = vsel %vm291, %v406, 0
    %419 = vmatprep.subr.mxu0 0.0
    %420 = vmatpush1.msra.mxu0 %v408
    %421 = vmatprep.subr.mxu0 0.0
    %422 = vmatpush1.msra.mxu0 %v410
    %423 = vmatprep.subr.mxu0 0.0
    %424 = vmatpush1.msra.mxu0 0.0
    %425 = vmatprep.subr.mxu0 0.0
    %426 = vmatpush1.msra.mxu0 0.0
    %427 = vmatprep.subr.mxu0 0.0
    %428 = vmatpush1.msra.mxu0 0.0
    %429 = vmatprep.subr.mxu0 0.0
    %430 = vmatpush1.msra.mxu0 0.0
    %431 = vmatprep.subr.mxu0 0.0
    %432 = vmatpush1.msra.mxu0 0.0
    %433 = vmatprep.subr.mxu0 0.0
    %434 = vmatpush1.msra.mxu0 0.0
    %435 = vmatprep.subr.mxu0 0.0
    %436 = vmatpush1.msra.mxu0 0.0
    %437 = vmatprep.subr.mxu0 0.0
    %438 = vmatpush1.msra.mxu0 0.0
    %439 = vmatprep.subr.mxu0 0.0
    %440 = vmatpush1.msra.mxu0 0.0
    %441 = vmatprep.subr.mxu0 0.0
    %442 = vmatpush1.msra.mxu0 0.0
    %443 = vmatprep.subr.mxu0 0.0
    %444 = vmatpush1.msra.mxu0 0.0
    %445 = vmatprep.subr.mxu0 0.0
    %446 = vmatpush1.msra.mxu0 0.0
    %447 = vmatprep.subr.mxu0 0.0
    %448 = vmatpush1.msra.mxu0 0.0
    %449 = vmatprep.subr.mxu0 0.0
    %450 = vmatpush1.msra.mxu0 0.0
    %451 = vmatprep.subr.mxu0 0.0
    %452 = vmatpush1.msra.mxu0 0.0
    %453 = vmatprep.subr.mxu0 0.0
    %454 = vmatpush1.msra.mxu0 0.0
    %455 = vmatprep.subr.mxu0 0.0
    %456 = vmatpush1.msra.mxu0 0.0
    %457 = vmatprep.subr.mxu0 0.0
    %458 = vmatpush1.msra.mxu0 0.0
    %459 = vmatprep.subr.mxu0 0.0
    %460 = vmatpush1.msra.mxu0 0.0
    %461 = vmatprep.subr.mxu0 0.0
    %462 = vmatpush1.msra.mxu0 0.0
    %463 = vmatprep.subr.mxu0 0.0
    %464 = vmatpush1.msra.mxu0 0.0
    %465 = vmatprep.subr.mxu0 0.0
    %466 = vmatpush1.msra.mxu0 0.0
    %467 = vmatprep.subr.mxu0 0.0
    %468 = vmatpush1.msra.mxu0 0.0
    %469 = vmatprep.subr.mxu0 0.0
    %470 = vmatpush1.msra.mxu0 0.0
    %471 = vmatprep.subr.mxu0 0.0
    %472 = vmatpush1.msra.mxu0 0.0
    %473 = vmatprep.subr.mxu0 0.0
    %474 = vmatpush1.msra.mxu0 0.0
    %475 = vmatprep.subr.mxu0 0.0
    %476 = vmatpush1.msra.mxu0 0.0
    %477 = vmatprep.subr.mxu0 0.0
    %478 = vmatpush1.msra.mxu0 0.0
    %479 = vmatprep.subr.mxu0 0.0
    %480 = vmatpush1.msra.mxu0 0.0
    %481 = vmatprep.subr.mxu0 0.0
    %482 = vmatpush1.msra.mxu0 0.0
    %483 = vmatprep.mubr.f32.mxu0 0.0
    %484 = vmatmul.mubr.f32.gmra.mrb[0].mxu0 %v414
    %v485 = vpop.f32.mrb[0].mxu0
    %v486 = vadd.f32 0.0, %v485
    %v487 = vpop.f32.mrb[0].mxu0
    %488 = vmatprep.mubr.f32.mxu0 0.0
    %489 = vmatmul.mubr.f32.gmra.mrb[0].mxu0 %v417
    %v490 = vpop.f32.mrb[0].mxu0
    %v491 = vadd.f32 0.0, %v490
    %v492 = vpop.f32.mrb[0].mxu0
    %493 = vdwg.mxu0
    %494 = vrot.lane.b32.xlu0 %v187, 64
    %v495 = vpop.permute.xlu0 %494
    %496 = vrot.lane.b32.xlu0 %v193, 64
    %v497 = vpop.permute.xlu0 %496
    %v501 = vsel %vm291, %v300, 0
    %v504 = vsel %vm291, %v301, 0
    %506 = vmatprep.subr.mxu0 0.0
    %507 = vmatpush1.msra.mxu0 %v495
    %508 = vmatprep.subr.mxu0 0.0
    %509 = vmatpush1.msra.mxu0 %v497
    %510 = vmatprep.subr.mxu0 0.0
    %511 = vmatpush1.msra.mxu0 0.0
    %512 = vmatprep.subr.mxu0 0.0
    %513 = vmatpush1.msra.mxu0 0.0
    %514 = vmatprep.subr.mxu0 0.0
    %515 = vmatpush1.msra.mxu0 0.0
    %516 = vmatprep.subr.mxu0 0.0
    %517 = vmatpush1.msra.mxu0 0.0
    %518 = vmatprep.subr.mxu0 0.0
    %519 = vmatpush1.msra.mxu0 0.0
    %520 = vmatprep.subr.mxu0 0.0
    %521 = vmatpush1.msra.mxu0 0.0
    %522 = vmatprep.subr.mxu0 0.0
    %523 = vmatpush1.msra.mxu0 0.0
    %524 = vmatprep.subr.mxu0 0.0
    %525 = vmatpush1.msra.mxu0 0.0
    %526 = vmatprep.subr.mxu0 0.0
    %527 = vmatpush1.msra.mxu0 0.0
    %528 = vmatprep.subr.mxu0 0.0
    %529 = vmatpush1.msra.mxu0 0.0
    %530 = vmatprep.subr.mxu0 0.0
    %531 = vmatpush1.msra.mxu0 0.0
    %532 = vmatprep.subr.mxu0 0.0
    %533 = vmatpush1.msra.mxu0 0.0
    %534 = vmatprep.subr.mxu0 0.0
    %535 = vmatpush1.msra.mxu0 0.0
    %536 = vmatprep.subr.mxu0 0.0
    %537 = vmatpush1.msra.mxu0 0.0
    %538 = vmatprep.subr.mxu0 0.0
    %539 = vmatpush1.msra.mxu0 0.0
    %540 = vmatprep.subr.mxu0 0.0
    %541 = vmatpush1.msra.mxu0 0.0
    %542 = vmatprep.subr.mxu0 0.0
    %543 = vmatpush1.msra.mxu0 0.0
    %544 = vmatprep.subr.mxu0 0.0
    %545 = vmatpush1.msra.mxu0 0.0
    %546 = vmatprep.subr.mxu0 0.0
    %547 = vmatpush1.msra.mxu0 0.0
    %548 = vmatprep.subr.mxu0 0.0
    %549 = vmatpush1.msra.mxu0 0.0
    %550 = vmatprep.subr.mxu0 0.0
    %551 = vmatpush1.msra.mxu0 0.0
    %552 = vmatprep.subr.mxu0 0.0
    %553 = vmatpush1.msra.mxu0 0.0
    %554 = vmatprep.subr.mxu0 0.0
    %555 = vmatpush1.msra.mxu0 0.0
    %556 = vmatprep.subr.mxu0 0.0
    %557 = vmatpush1.msra.mxu0 0.0
    %558 = vmatprep.subr.mxu0 0.0
    %559 = vmatpush1.msra.mxu0 0.0
    %560 = vmatprep.subr.mxu0 0.0
    %561 = vmatpush1.msra.mxu0 0.0
    %562 = vmatprep.subr.mxu0 0.0
    %563 = vmatpush1.msra.mxu0 0.0
    %564 = vmatprep.subr.mxu0 0.0
    %565 = vmatpush1.msra.mxu0 0.0
    %566 = vmatprep.subr.mxu0 0.0
    %567 = vmatpush1.msra.mxu0 0.0
    %568 = vmatprep.subr.mxu0 0.0
    %569 = vmatpush1.msra.mxu0 0.0
    %570 = vmatprep.mubr.f32.mxu0 0.0
    %571 = vmatmul.mubr.f32.gmra.mrb[0].mxu0 %v501
    %v572 = vpop.f32.mrb[0].mxu0
    %v573 = vadd.f32 %v486, %v572
    %v574 = vpop.f32.mrb[0].mxu0
    %575 = vmatprep.mubr.f32.mxu0 0.0
    %576 = vmatmul.mubr.f32.gmra.mrb[0].mxu0 %v504
    %v577 = vpop.f32.mrb[0].mxu0
    %v578 = vadd.f32 %v491, %v577
    %v579 = vpop.f32.mrb[0].mxu0
    %580 = vdwg.mxu0
    %581 = vrot.lane.b32.xlu0 %v187, 112
    %v582 = vpop.permute.xlu0 %581
    %583 = vrot.lane.b32.xlu0 %v193, 112
    %v584 = vpop.permute.xlu0 %583
    %585 = vrot.lane.b32.xlu0 %v187, 80
    %v586 = vpop.permute.xlu0 %585
    %587 = vrot.lane.b32.xlu0 %v193, 80
    %v588 = vpop.permute.xlu0 %587
    %v589 = vsel %vm203, %v582, 0
    %v591 = vsel %vm203, %v584, 0
    %v593 = vsel %vm203, %v586, 0
    %v595 = vsel %vm203, %v588, 0
    %597 = vmatprep.subr.mxu0 0.0
    %598 = vmatpush1.xpose.msra.mxu0 %v593
    %599 = vmatprep.subr.mxu0 0.0
    %600 = vmatpush1.xpose.msra.mxu0 %v595
    %601 = vmatprep.subr.mxu0 0.0
    %602 = vmatpush1.xpose.msra.mxu0 0.0
    %603 = vmatprep.subr.mxu0 0.0
    %604 = vmatpush1.xpose.msra.mxu0 0.0
    %605 = vmatprep.subr.mxu0 0.0
    %606 = vmatpush1.xpose.msra.mxu0 0.0
    %607 = vmatprep.subr.mxu0 0.0
    %608 = vmatpush1.xpose.msra.mxu0 0.0
    %609 = vmatprep.subr.mxu0 0.0
    %610 = vmatpush1.xpose.msra.mxu0 0.0
    %611 = vmatprep.subr.mxu0 0.0
    %612 = vmatpush1.xpose.msra.mxu0 0.0
    %613 = vmatprep.subr.mxu0 0.0
    %614 = vmatpush1.xpose.msra.mxu0 0.0
    %615 = vmatprep.subr.mxu0 0.0
    %616 = vmatpush1.xpose.msra.mxu0 0.0
    %617 = vmatprep.subr.mxu0 0.0
    %618 = vmatpush1.xpose.msra.mxu0 0.0
    %619 = vmatprep.subr.mxu0 0.0
    %620 = vmatpush1.xpose.msra.mxu0 0.0
    %621 = vmatprep.subr.mxu0 0.0
    %622 = vmatpush1.xpose.msra.mxu0 0.0
    %623 = vmatprep.subr.mxu0 0.0
    %624 = vmatpush1.xpose.msra.mxu0 0.0
    %625 = vmatprep.subr.mxu0 0.0
    %626 = vmatpush1.xpose.msra.mxu0 0.0
    %627 = vmatprep.subr.mxu0 0.0
    %628 = vmatpush1.xpose.msra.mxu0 0.0
    %629 = vmatprep.subr.mxu0 0.0
    %630 = vmatpush1.xpose.msra.mxu0 0.0
    %631 = vmatprep.subr.mxu0 0.0
    %632 = vmatpush1.xpose.msra.mxu0 0.0
    %633 = vmatprep.subr.mxu0 0.0
    %634 = vmatpush1.xpose.msra.mxu0 0.0
    %635 = vmatprep.subr.mxu0 0.0
    %636 = vmatpush1.xpose.msra.mxu0 0.0
    %637 = vmatprep.subr.mxu0 0.0
    %638 = vmatpush1.xpose.msra.mxu0 0.0
    %639 = vmatprep.subr.mxu0 0.0
    %640 = vmatpush1.xpose.msra.mxu0 0.0
    %641 = vmatprep.subr.mxu0 0.0
    %642 = vmatpush1.xpose.msra.mxu0 0.0
    %643 = vmatprep.subr.mxu0 0.0
    %644 = vmatpush1.xpose.msra.mxu0 0.0
    %645 = vmatprep.subr.mxu0 0.0
    %646 = vmatpush1.xpose.msra.mxu0 0.0
    %647 = vmatprep.subr.mxu0 0.0
    %648 = vmatpush1.xpose.msra.mxu0 0.0
    %649 = vmatprep.subr.mxu0 0.0
    %650 = vmatpush1.xpose.msra.mxu0 0.0
    %651 = vmatprep.subr.mxu0 0.0
    %652 = vmatpush1.xpose.msra.mxu0 0.0
    %653 = vmatprep.subr.mxu0 0.0
    %654 = vmatpush1.xpose.msra.mxu0 0.0
    %655 = vmatprep.subr.mxu0 0.0
    %656 = vmatpush1.xpose.msra.mxu0 0.0
    %657 = vmatprep.subr.mxu0 0.0
    %658 = vmatpush1.xpose.msra.mxu0 0.0
    %659 = vmatprep.subr.mxu0 0.0
    %660 = vmatpush1.xpose.msra.mxu0 0.0
    %661 = vmatprep.mubr.f32.mxu0 0.0
    %662 = vmatmul.mubr.f32.gmra.mrb[0].mxu0 %v589
    %v663 = vpop.f32.mrb[0].mxu0
    %v664 = vadd.f32 %v34, %v663
    %v665 = vpop.f32.mrb[0].mxu0
    %666 = vmatprep.mubr.f32.mxu0 0.0
    %667 = vmatmul.mubr.f32.gmra.mrb[0].mxu0 %v591
    %v668 = vpop.f32.mrb[0].mxu0
    %v669 = vadd.f32 %v35, %v668
    %v670 = vpop.f32.mrb[0].mxu0
    %671 = vdwg.mxu0
    %v672 = vmul.f32 %v664, 1.442695
    %v673 = vpow.pop %v672
    %v674 = vmul.f32 %v669, 1.442695
    %v675 = vpow.pop %v674
    %v676 = vsel %vm291, %v673, 0.0
    %677 = vadd.xlane.f32.xlu0 %v676
    %v678 = vpop.xlane.xlu0 %677
    %v679 = vsel %vm291, %v675, 0.0
    %680 = vadd.xlane.f32.xlu0 %v679
    %v681 = vpop.xlane.xlu0 %680
    %v682 = vrcp.pop %v678
    %v683 = vrcp.pop %v681
    %v684 = vmul.f32 %v673, %v682
    %v685 = vmul.f32 %v675, %v683
    %v687 = vsel %vm291, %v684, 0
    %v690 = vsel %vm291, %v685, 0
    %692 = vmatprep.subr.mxu0 0.0
    %693 = vmatpush1.msra.mxu0 %v189
    %694 = vmatprep.subr.mxu0 0.0
    %695 = vmatpush1.msra.mxu0 %v195
    %696 = vmatprep.subr.mxu0 0.0
    %697 = vmatpush1.msra.mxu0 0.0
    %698 = vmatprep.subr.mxu0 0.0
    %699 = vmatpush1.msra.mxu0 0.0
    %700 = vmatprep.subr.mxu0 0.0
    %701 = vmatpush1.msra.mxu0 0.0
    %702 = vmatprep.subr.mxu0 0.0
    %703 = vmatpush1.msra.mxu0 0.0
    %704 = vmatprep.subr.mxu0 0.0
    %705 = vmatpush1.msra.mxu0 0.0
    %706 = vmatprep.subr.mxu0 0.0
    %707 = vmatpush1.msra.mxu0 0.0
    %708 = vmatprep.subr.mxu0 0.0
    %709 = vmatpush1.msra.mxu0 0.0
    %710 = vmatprep.subr.mxu0 0.0
    %711 = vmatpush1.msra.mxu0 0.0
    %712 = vmatprep.subr.mxu0 0.0
    %713 = vmatpush1.msra.mxu0 0.0
    %714 = vmatprep.subr.mxu0 0.0
    %715 = vmatpush1.msra.mxu0 0.0
    %716 = vmatprep.subr.mxu0 0.0
    %717 = vmatpush1.msra.mxu0 0.0
    %718 = vmatprep.subr.mxu0 0.0
    %719 = vmatpush1.msra.mxu0 0.0
    %720 = vmatprep.subr.mxu0 0.0
    %721 = vmatpush1.msra.mxu0 0.0
    %722 = vmatprep.subr.mxu0 0.0
    %723 = vmatpush1.msra.mxu0 0.0
    %724 = vmatprep.subr.mxu0 0.0
    %725 = vmatpush1.msra.mxu0 0.0
    %726 = vmatprep.subr.mxu0 0.0
    %727 = vmatpush1.msra.mxu0 0.0
    %728 = vmatprep.subr.mxu0 0.0
    %729 = vmatpush1.msra.mxu0 0.0
    %730 = vmatprep.subr.mxu0 0.0
    %731 = vmatpush1.msra.mxu0 0.0
    %732 = vmatprep.subr.mxu0 0.0
    %733 = vmatpush1.msra.mxu0 0.0
    %734 = vmatprep.subr.mxu0 0.0
    %735 = vmatpush1.msra.mxu0 0.0
    %736 = vmatprep.subr.mxu0 0.0
    %737 = vmatpush1.msra.mxu0 0.0
    %738 = vmatprep.subr.mxu0 0.0
    %739 = vmatpush1.msra.mxu0 0.0
    %740 = vmatprep.subr.mxu0 0.0
    %741 = vmatpush1.msra.mxu0 0.0
    %742 = vmatprep.subr.mxu0 0.0
    %743 = vmatpush1.msra.mxu0 0.0
    %744 = vmatprep.subr.mxu0 0.0
    %745 = vmatpush1.msra.mxu0 0.0
    %746 = vmatprep.subr.mxu0 0.0
    %747 = vmatpush1.msra.mxu0 0.0
    %748 = vmatprep.subr.mxu0 0.0
    %749 = vmatpush1.msra.mxu0 0.0
    %750 = vmatprep.subr.mxu0 0.0
    %751 = vmatpush1.msra.mxu0 0.0
    %752 = vmatprep.subr.mxu0 0.0
    %753 = vmatpush1.msra.mxu0 0.0
    %754 = vmatprep.subr.mxu0 0.0
    %755 = vmatpush1.msra.mxu0 0.0
    %756 = vmatprep.mubr.f32.mxu0 0.0
    %757 = vmatmul.mubr.f32.gmra.mrb[0].mxu0 %v687
    %v758 = vpop.f32.mrb[0].mxu0
    %v759 = vadd.f32 0.0, %v758
    %v760 = vpop.f32.mrb[0].mxu0
    %761 = vmatprep.mubr.f32.mxu0 0.0
    %762 = vmatmul.mubr.f32.gmra.mrb[0].mxu0 %v690
    %v763 = vpop.f32.mrb[0].mxu0
    %v764 = vadd.f32 0.0, %v763
    %v765 = vpop.f32.mrb[0].mxu0
    %766 = vdwg.mxu0
    %v767 = vadd.f32 %v573, %v759
    %v768 = vadd.f32 %v578, %v764
    %769 = vrot.lane.b32.xlu0 %v187, 104
    %v770 = vpop.permute.xlu0 %769
    %771 = vrot.lane.b32.xlu0 %v193, 104
    %v772 = vpop.permute.xlu0 %771
    %773 = vrot.lane.b32.xlu0 %v187, 72
    %v774 = vpop.permute.xlu0 %773
    %775 = vrot.lane.b32.xlu0 %v193, 72
    %v776 = vpop.permute.xlu0 %775
    %v777 = vsel %vm203, %v770, 0
    %v779 = vsel %vm203, %v772, 0
    %v781 = vsel %vm203, %v774, 0
    %v783 = vsel %vm203, %v776, 0
    %785 = vmatprep.subr.mxu0 0.0
    %786 = vmatpush1.xpose.msra.mxu0 %v781
    %787 = vmatprep.subr.mxu0 0.0
    %788 = vmatpush1.xpose.msra.mxu0 %v783
    %789 = vmatprep.subr.mxu0 0.0
    %790 = vmatpush1.xpose.msra.mxu0 0.0
    %791 = vmatprep.subr.mxu0 0.0
    %792 = vmatpush1.xpose.msra.mxu0 0.0
    %793 = vmatprep.subr.mxu0 0.0
    %794 = vmatpush1.xpose.msra.mxu0 0.0
    %795 = vmatprep.subr.mxu0 0.0
    %796 = vmatpush1.xpose.msra.mxu0 0.0
    %797 = vmatprep.subr.mxu0 0.0
    %798 = vmatpush1.xpose.msra.mxu0 0.0
    %799 = vmatprep.subr.mxu0 0.0
    %800 = vmatpush1.xpose.msra.mxu0 0.0
    %801 = vmatprep.subr.mxu0 0.0
    %802 = vmatpush1.xpose.msra.mxu0 0.0
    %803 = vmatprep.subr.mxu0 0.0
    %804 = vmatpush1.xpose.msra.mxu0 0.0
    %805 = vmatprep.subr.mxu0 0.0
    %806 = vmatpush1.xpose.msra.mxu0 0.0
    %807 = vmatprep.subr.mxu0 0.0
    %808 = vmatpush1.xpose.msra.mxu0 0.0
    %809 = vmatprep.subr.mxu0 0.0
    %810 = vmatpush1.xpose.msra.mxu0 0.0
    %811 = vmatprep.subr.mxu0 0.0
    %812 = vmatpush1.xpose.msra.mxu0 0.0
    %813 = vmatprep.subr.mxu0 0.0
    %814 = vmatpush1.xpose.msra.mxu0 0.0
    %815 = vmatprep.subr.mxu0 0.0
    %816 = vmatpush1.xpose.msra.mxu0 0.0
    %817 = vmatprep.subr.mxu0 0.0
    %818 = vmatpush1.xpose.msra.mxu0 0.0
    %819 = vmatprep.subr.mxu0 0.0
    %820 = vmatpush1.xpose.msra.mxu0 0.0
    %821 = vmatprep.subr.mxu0 0.0
    %822 = vmatpush1.xpose.msra.mxu0 0.0
    %823 = vmatprep.subr.mxu0 0.0
    %824 = vmatpush1.xpose.msra.mxu0 0.0
    %825 = vmatprep.subr.mxu0 0.0
    %826 = vmatpush1.xpose.msra.mxu0 0.0
    %827 = vmatprep.subr.mxu0 0.0
    %828 = vmatpush1.xpose.msra.mxu0 0.0
    %829 = vmatprep.subr.mxu0 0.0
    %830 = vmatpush1.xpose.msra.mxu0 0.0
    %831 = vmatprep.subr.mxu0 0.0
    %832 = vmatpush1.xpose.msra.mxu0 0.0
    %833 = vmatprep.subr.mxu0 0.0
    %834 = vmatpush1.xpose.msra.mxu0 0.0
    %835 = vmatprep.subr.mxu0 0.0
    %836 = vmatpush1.xpose.msra.mxu0 0.0
    %837 = vmatprep.subr.mxu0 0.0
    %838 = vmatpush1.xpose.msra.mxu0 0.0
    %839 = vmatprep.subr.mxu0 0.0
    %840 = vmatpush1.xpose.msra.mxu0 0.0
    %841 = vmatprep.subr.mxu0 0.0
    %842 = vmatpush1.xpose.msra.mxu0 0.0
    %843 = vmatprep.subr.mxu0 0.0
    %844 = vmatpush1.xpose.msra.mxu0 0.0
    %845 = vmatprep.subr.mxu0 0.0
    %846 = vmatpush1.xpose.msra.mxu0 0.0
    %847 = vmatprep.subr.mxu0 0.0
    %848 = vmatpush1.xpose.msra.mxu0 0.0
    %849 = vmatprep.mubr.f32.mxu0 0.0
    %850 = vmatmul.mubr.f32.gmra.mrb[0].mxu0 %v777
    %v851 = vpop.f32.mrb[0].mxu0
    %v852 = vadd.f32 %v34, %v851
    %v853 = vpop.f32.mrb[0].mxu0
    %854 = vmatprep.mubr.f32.mxu0 0.0
    %855 = vmatmul.mubr.f32.gmra.mrb[0].mxu0 %v779
    %v856 = vpop.f32.mrb[0].mxu0
    %v857 = vadd.f32 %v35, %v856
    %v858 = vpop.f32.mrb[0].mxu0
    %859 = vdwg.mxu0
    %v860 = vmul.f32 %v852, 1.442695
    %v861 = vpow.pop %v860
    %v862 = vmul.f32 %v857, 1.442695
    %v863 = vpow.pop %v862
    %v864 = vsel %vm291, %v861, 0.0
    %865 = vadd.xlane.f32.xlu0 %v864
    %v866 = vpop.xlane.xlu0 %865
    %v867 = vsel %vm291, %v863, 0.0
    %868 = vadd.xlane.f32.xlu0 %v867
    %v869 = vpop.xlane.xlu0 %868
    %v870 = vrcp.pop %v866
    %v871 = vrcp.pop %v869
    %v872 = vmul.f32 %v861, %v870
    %v873 = vmul.f32 %v863, %v871
    %876 = vrot.lane.b32.xlu0 %v189, 96
    %v877 = vpop.permute.xlu0 %876
    %878 = vrot.lane.b32.xlu0 %v195, 96
    %v879 = vpop.permute.xlu0 %878
    %v883 = vsel %vm291, %v872, 0
    %v886 = vsel %vm291, %v873, 0
    %888 = vmatprep.subr.mxu0 0.0
    %889 = vmatpush1.msra.mxu0 %v877
    %890 = vmatprep.subr.mxu0 0.0
    %891 = vmatpush1.msra.mxu0 %v879
    %892 = vmatprep.subr.mxu0 0.0
    %893 = vmatpush1.msra.mxu0 0.0
    %894 = vmatprep.subr.mxu0 0.0
    %895 = vmatpush1.msra.mxu0 0.0
    %896 = vmatprep.subr.mxu0 0.0
    %897 = vmatpush1.msra.mxu0 0.0
    %898 = vmatprep.subr.mxu0 0.0
    %899 = vmatpush1.msra.mxu0 0.0
    %900 = vmatprep.subr.mxu0 0.0
    %901 = vmatpush1.msra.mxu0 0.0
    %902 = vmatprep.subr.mxu0 0.0
    %903 = vmatpush1.msra.mxu0 0.0
    %904 = vmatprep.subr.mxu0 0.0
    %905 = vmatpush1.msra.mxu0 0.0
    %906 = vmatprep.subr.mxu0 0.0
    %907 = vmatpush1.msra.mxu0 0.0
    %908 = vmatprep.subr.mxu0 0.0
    %909 = vmatpush1.msra.mxu0 0.0
    %910 = vmatprep.subr.mxu0 0.0
    %911 = vmatpush1.msra.mxu0 0.0
    %912 = vmatprep.subr.mxu0 0.0
    %913 = vmatpush1.msra.mxu0 0.0
    %914 = vmatprep.subr.mxu0 0.0
    %915 = vmatpush1.msra.mxu0 0.0
    %916 = vmatprep.subr.mxu0 0.0
    %917 = vmatpush1.msra.mxu0 0.0
    %918 = vmatprep.subr.mxu0 0.0
    %919 = vmatpush1.msra.mxu0 0.0
    %920 = vmatprep.subr.mxu0 0.0
    %921 = vmatpush1.msra.mxu0 0.0
    %922 = vmatprep.subr.mxu0 0.0
    %923 = vmatpush1.msra.mxu0 0.0
    %924 = vmatprep.subr.mxu0 0.0
    %925 = vmatpush1.msra.mxu0 0.0
    %926 = vmatprep.subr.mxu0 0.0
    %927 = vmatpush1.msra.mxu0 0.0
    %928 = vmatprep.subr.mxu0 0.0
    %929 = vmatpush1.msra.mxu0 0.0
    %930 = vmatprep.subr.mxu0 0.0
    %931 = vmatpush1.msra.mxu0 0.0
    %932 = vmatprep.subr.mxu0 0.0
    %933 = vmatpush1.msra.mxu0 0.0
    %934 = vmatprep.subr.mxu0 0.0
    %935 = vmatpush1.msra.mxu0 0.0
    %936 = vmatprep.subr.mxu0 0.0
    %937 = vmatpush1.msra.mxu0 0.0
    %938 = vmatprep.subr.mxu0 0.0
    %939 = vmatpush1.msra.mxu0 0.0
    %940 = vmatprep.subr.mxu0 0.0
    %941 = vmatpush1.msra.mxu0 0.0
    %942 = vmatprep.subr.mxu0 0.0
    %943 = vmatpush1.msra.mxu0 0.0
    %944 = vmatprep.subr.mxu0 0.0
    %945 = vmatpush1.msra.mxu0 0.0
    %946 = vmatprep.subr.mxu0 0.0
    %947 = vmatpush1.msra.mxu0 0.0
    %948 = vmatprep.subr.mxu0 0.0
    %949 = vmatpush1.msra.mxu0 0.0
    %950 = vmatprep.subr.mxu0 0.0
    %951 = vmatpush1.msra.mxu0 0.0
    %952 = vmatprep.mubr.f32.mxu0 0.0
    %953 = vmatmul.mubr.f32.gmra.mrb[0].mxu0 %v883
    %v954 = vpop.f32.mrb[0].mxu0
    %v955 = vadd.f32 0.0, %v954
    %v956 = vpop.f32.mrb[0].mxu0
    %957 = vmatprep.mubr.f32.mxu0 0.0
    %958 = vmatmul.mubr.f32.gmra.mrb[0].mxu0 %v886
    %v959 = vpop.f32.mrb[0].mxu0
    %v960 = vadd.f32 0.0, %v959
    %v961 = vpop.f32.mrb[0].mxu0
    %962 = vdwg.mxu0
    %v963 = vadd.f32 %v767, %v955
    %v964 = vadd.f32 %v768, %v960
    %v965 = vadd.f32 %v32, %v963
    %v966 = vadd.f32 %v33, %v964
    %v967 = vlaneseq
    %v968 = vshrl.u32 %v967, 7
    %v969 = vsub.s32 0, %v968
    %v970 = vrot.slane %v52, %v969
    %v971 = vadd.f32 %v965, %v970
    %v972 = vadd.f32 %v966, %v970
    %v973 = vlaneseq
    %v974 = vshrl.u32 %v973, 7
    %v975 = vsub.s32 0, %v974
    %v976 = vrot.slane %v40, %v975
    %v978 = vsel %vm53, %v971, 0
    %v981 = vsel %vm53, %v972, 0
    %983 = vmatprep.subr.mxu0 0.0
    %984 = vmatpush1.msra.mxu0 %v36
    %985 = vmatprep.subr.mxu0 0.0
    %986 = vmatpush1.msra.mxu0 %v37
    %987 = vmatprep.subr.mxu0 0.0
    %988 = vmatpush1.msra.mxu0 %v38
    %989 = vmatprep.subr.mxu0 0.0
    %990 = vmatpush1.msra.mxu0 %v39
    %991 = vmatprep.subr.mxu0 0.0
    %992 = vmatpush1.msra.mxu0 0.0
    %993 = vmatprep.subr.mxu0 0.0
    %994 = vmatpush1.msra.mxu0 0.0
    %995 = vmatprep.subr.mxu0 0.0
    %996 = vmatpush1.msra.mxu0 0.0
    %997 = vmatprep.subr.mxu0 0.0
    %998 = vmatpush1.msra.mxu0 0.0
    %999 = vmatprep.subr.mxu0 0.0
    %1000 = vmatpush1.msra.mxu0 0.0
    %1001 = vmatprep.subr.mxu0 0.0
    %1002 = vmatpush1.msra.mxu0 0.0
    %1003 = vmatprep.subr.mxu0 0.0
    %1004 = vmatpush1.msra.mxu0 0.0
    %1005 = vmatprep.subr.mxu0 0.0
    %1006 = vmatpush1.msra.mxu0 0.0
    %1007 = vmatprep.subr.mxu0 0.0
    %1008 = vmatpush1.msra.mxu0 0.0
    %1009 = vmatprep.subr.mxu0 0.0
    %1010 = vmatpush1.msra.mxu0 0.0
    %1011 = vmatprep.subr.mxu0 0.0
    %1012 = vmatpush1.msra.mxu0 0.0
    %1013 = vmatprep.subr.mxu0 0.0
    %1014 = vmatpush1.msra.mxu0 0.0
    %1015 = vmatprep.subr.mxu0 0.0
    %1016 = vmatpush1.msra.mxu0 0.0
    %1017 = vmatprep.subr.mxu0 0.0
    %1018 = vmatpush1.msra.mxu0 0.0
    %1019 = vmatprep.subr.mxu0 0.0
    %1020 = vmatpush1.msra.mxu0 0.0
    %1021 = vmatprep.subr.mxu0 0.0
    %1022 = vmatpush1.msra.mxu0 0.0
    %1023 = vmatprep.subr.mxu0 0.0
    %1024 = vmatpush1.msra.mxu0 0.0
    %1025 = vmatprep.subr.mxu0 0.0
    %1026 = vmatpush1.msra.mxu0 0.0
    %1027 = vmatprep.subr.mxu0 0.0
    %1028 = vmatpush1.msra.mxu0 0.0
    %1029 = vmatprep.subr.mxu0 0.0
    %1030 = vmatpush1.msra.mxu0 0.0
    %1031 = vmatprep.subr.mxu0 0.0
    %1032 = vmatpush1.msra.mxu0 0.0
    %1033 = vmatprep.subr.mxu0 0.0
    %1034 = vmatpush1.msra.mxu0 0.0
    %1035 = vmatprep.subr.mxu0 0.0
    %1036 = vmatpush1.msra.mxu0 0.0
    %1037 = vmatprep.subr.mxu0 0.0
    %1038 = vmatpush1.msra.mxu0 0.0
    %1039 = vmatprep.subr.mxu0 0.0
    %1040 = vmatpush1.msra.mxu0 0.0
    %1041 = vmatprep.subr.mxu0 0.0
    %1042 = vmatpush1.msra.mxu0 0.0
    %1043 = vmatprep.subr.mxu0 0.0
    %1044 = vmatpush1.msra.mxu0 0.0
    %1045 = vmatprep.subr.mxu0 0.0
    %1046 = vmatpush1.msra.mxu0 0.0
    %1047 = vmatprep.mubr.f32.mxu0 0.0
    %1048 = vmatmul.mubr.f32.gmra.mrb[0].mxu0 %v978
    %v1049 = vpop.f32.mrb[0].mxu0
    %v1050 = vadd.f32 %v976, %v1049
    %v1051 = vpop.f32.mrb[0].mxu0
    %1052 = vmatprep.mubr.f32.mxu0 0.0
    %1053 = vmatmul.mubr.f32.gmra.mrb[0].mxu0 %v981
    %v1054 = vpop.f32.mrb[0].mxu0
    %v1055 = vadd.f32 %v976, %v1054
    %v1056 = vpop.f32.mrb[0].mxu0
    %1057 = vdwg.mxu0
    %v1058 = vmax.f32 %v1050, 0.0
    %v1059 = vmax.f32 %v1055, 0.0
    %v1060 = vlaneseq
    %v1061 = vshrl.u32 %v1060, 7
    %v1062 = vsub.s32 0, %v1061
    %v1063 = vrot.slane %v49, %v1062
    %vm1064 = vcmask 523264
    %v1066 = vsel %vm1064, %v1058, 0
    %v1069 = vsel %vm1064, %v1059, 0
    %1071 = vmatprep.subr.mxu0 0.0
    %1072 = vmatpush1.msra.mxu0 %v41
    %1073 = vmatprep.subr.mxu0 0.0
    %1074 = vmatpush1.msra.mxu0 %v42
    %1075 = vmatprep.subr.mxu0 0.0
    %1076 = vmatpush1.msra.mxu0 %v43
    %1077 = vmatprep.subr.mxu0 0.0
    %1078 = vmatpush1.msra.mxu0 %v44
    %1079 = vmatprep.subr.mxu0 0.0
    %1080 = vmatpush1.msra.mxu0 %v45
    %1081 = vmatprep.subr.mxu0 0.0
    %1082 = vmatpush1.msra.mxu0 %v46
    %1083 = vmatprep.subr.mxu0 0.0
    %1084 = vmatpush1.msra.mxu0 %v47
    %1085 = vmatprep.subr.mxu0 0.0
    %1086 = vmatpush1.msra.mxu0 %v48
    %1087 = vmatprep.subr.mxu0 0.0
    %1088 = vmatpush1.msra.mxu0 0.0
    %1089 = vmatprep.subr.mxu0 0.0
    %1090 = vmatpush1.msra.mxu0 0.0
    %1091 = vmatprep.subr.mxu0 0.0
    %1092 = vmatpush1.msra.mxu0 0.0
    %1093 = vmatprep.subr.mxu0 0.0
    %1094 = vmatpush1.msra.mxu0 0.0
    %1095 = vmatprep.subr.mxu0 0.0
    %1096 = vmatpush1.msra.mxu0 0.0
    %1097 = vmatprep.subr.mxu0 0.0
    %1098 = vmatpush1.msra.mxu0 0.0
    %1099 = vmatprep.subr.mxu0 0.0
    %1100 = vmatpush1.msra.mxu0 0.0
    %1101 = vmatprep.subr.mxu0 0.0
    %1102 = vmatpush1.msra.mxu0 0.0
    %1103 = vmatprep.subr.mxu0 0.0
    %1104 = vmatpush1.msra.mxu0 0.0
    %1105 = vmatprep.subr.mxu0 0.0
    %1106 = vmatpush1.msra.mxu0 0.0
    %1107 = vmatprep.subr.mxu0 0.0
    %1108 = vmatpush1.msra.mxu0 0.0
    %1109 = vmatprep.subr.mxu0 0.0
    %1110 = vmatpush1.msra.mxu0 0.0
    %1111 = vmatprep.subr.mxu0 0.0
    %1112 = vmatpush1.msra.mxu0 0.0
    %1113 = vmatprep.subr.mxu0 0.0
    %1114 = vmatpush1.msra.mxu0 0.0
    %1115 = vmatprep.subr.mxu0 0.0
    %1116 = vmatpush1.msra.mxu0 0.0
    %1117 = vmatprep.subr.mxu0 0.0
    %1118 = vmatpush1.msra.mxu0 0.0
    %1119 = vmatprep.subr.mxu0 0.0
    %1120 = vmatpush1.msra.mxu0 0.0
    %1121 = vmatprep.subr.mxu0 0.0
    %1122 = vmatpush1.msra.mxu0 0.0
    %1123 = vmatprep.subr.mxu0 0.0
    %1124 = vmatpush1.msra.mxu0 0.0
    %1125 = vmatprep.subr.mxu0 0.0
    %1126 = vmatpush1.msra.mxu0 0.0
    %1127 = vmatprep.subr.mxu0 0.0
    %1128 = vmatpush1.msra.mxu0 0.0
    %1129 = vmatprep.subr.mxu0 0.0
    %1130 = vmatpush1.msra.mxu0 0.0
    %1131 = vmatprep.subr.mxu0 0.0
    %1132 = vmatpush1.msra.mxu0 0.0
    %1133 = vmatprep.subr.mxu0 0.0
    %1134 = vmatpush1.msra.mxu0 0.0
    %1135 = vmatprep.mubr.f32.mxu0 0.0
    %1136 = vmatmul.mubr.f32.gmra.mrb[0].mxu0 %v1066
    %v1137 = vpop.f32.mrb[0].mxu0
    %v1138 = vadd.f32 %v1063, %v1137
    %v1139 = vpop.f32.mrb[0].mxu0
    %1140 = vmatprep.mubr.f32.mxu0 0.0
    %1141 = vmatmul.mubr.f32.gmra.mrb[0].mxu0 %v1069
    %v1142 = vpop.f32.mrb[0].mxu0
    %v1143 = vadd.f32 %v1063, %v1142
    %v1144 = vpop.f32.mrb[0].mxu0
    %1145 = vdwg.mxu0
    %v1146 = vld [vmem:[%s0 + $0x20] sm:$0xff]
    %v1147 = vld [vmem:[%s0 + $0x28] sm:$0xff]
    %v1148 = vadd.f32 %v971, %v1138
    %v1149 = vadd.f32 %v972, %v1143
    %v1150 = vadd.f32 %v1148, %v1146
    %v1151 = vadd.f32 %v1149, %v1147
    %v1152 = vld [vmem:[%s0 + $0x81] sm:$0x1]
    %v1153 = vld [vmem:[%s0 + $0x83] sm:$0x1]
    %v1154 = vld [vmem:[%s0 + $0x85] sm:$0x1]
    %v1155 = vsel %vm53, %v1150, 0.0
    %1156 = vadd.xlane.f32.xlu0 %v1155
    %v1157 = vpop.xlane.xlu0 %1156
    %v1158 = vsel %vm53, %v1151, 0.0
    %1159 = vadd.xlane.f32.xlu0 %v1158
    %v1160 = vpop.xlane.xlu0 %1159
    %v1161 = vmul.f32 %v1157, %v60
    %v1162 = vmul.f32 %v1160, %v60
    %v1163 = vsub.f32 %v1150, %v1161
    %v1164 = vsub.f32 %v1151, %v1162
    %v1165 = vmul.f32 %v1163, %v1163
    %v1166 = vmul.f32 %v1164, %v1164
    %v1167 = vsel %vm53, %v1165, 0.0
    %1168 = vadd.xlane.f32.xlu0 %v1167
    %v1169 = vpop.xlane.xlu0 %1168
    %v1170 = vsel %vm53, %v1166, 0.0
    %1171 = vadd.xlane.f32.xlu0 %v1170
    %v1172 = vpop.xlane.xlu0 %1171
    %v1173 = vmul.f32 %v1169, %v60
    %v1174 = vmul.f32 %v1172, %v60
    %v1175 = vadd.f32 %v1173, 1e-05
    %v1176 = vadd.f32 %v1174, 1e-05
    %v1177 = vrsqrt.pop %v1175
    %v1178 = vrsqrt.pop %v1176
    %v1179 = vmul.f32 %v1163, %v1177
    %v1180 = vmul.f32 %v1164, %v1178
    %v1181 = vlaneseq
    %v1182 = vshrl.u32 %v1181, 7
    %v1183 = vsub.s32 0, %v1182
    %v1184 = vrot.slane %v1152, %v1183
    %v1185 = vmul.f32 %v1179, %v1184
    %v1186 = vmul.f32 %v1180, %v1184
    %v1187 = vlaneseq
    %v1188 = vshrl.u32 %v1187, 7
    %v1189 = vsub.s32 0, %v1188
    %v1190 = vrot.slane %v1153, %v1189
    %v1191 = vadd.f32 %v1185, %v1190
    %v1192 = vadd.f32 %v1186, %v1190
    %v1193 = vld [vmem:[%s1 + $0x40] sm:$0xff]
    %v1194 = vld [vmem:[%s1 + $0x48] sm:$0xff]
    %v1195 = vld [vmem:[%s1 + $0x50] sm:$0xff]
    %v1196 = vld [vmem:[%s1 + $0x58] sm:$0xff]
    %v1197 = vld [vmem:[%s1 + $0x60] sm:$0xff]
    %v1198 = vld [vmem:[%s1 + $0x68] sm:$0xff]
    %v1199 = vld [vmem:[%s1 + $0x70] sm:$0xff]
    %v1200 = vld [vmem:[%s1 + $0x78] sm:$0xff]
    %s1201 = scalar_lea.vmem %s1, 129
    %v1202 = vld [vmem:[%s1201] ss:$8 sm:$0x3]
    %v1204 = vlaneseq
    %v1205 = vshrl.u32 %v1204, 7
    %v1206 = vsub.s32 0, %v1205
    %v1207 = vrot.slane %v1202, %v1206
    %v1208 = vlaneseq
    %v1209 = vshrl.u32 %v1208, 7
    %v1210 = vsub.s32 1, %v1209
    %v1211 = vrot.slane %v1202, %v1210
    %v1215 = vsel %vm53, %v1191, 0
    %v1218 = vsel %vm53, %v1192, 0
    %1220 = vmatprep.subr.mxu0 %v1194
    %1221 = vmatpush1.msra.mxu0 %v1193
    %1222 = vmatprep.subr.mxu0 %v1196
    %1223 = vmatpush1.msra.mxu0 %v1195
    %1224 = vmatprep.subr.mxu0 %v1198
    %1225 = vmatpush1.msra.mxu0 %v1197
    %1226 = vmatprep.subr.mxu0 %v1200
    %1227 = vmatpush1.msra.mxu0 %v1199
    %1228 = vmatprep.subr.mxu0 0.0
    %1229 = vmatpush1.msra.mxu0 0.0
    %1230 = vmatprep.subr.mxu0 0.0
    %1231 = vmatpush1.msra.mxu0 0.0
    %1232 = vmatprep.subr.mxu0 0.0
    %1233 = vmatpush1.msra.mxu0 0.0
    %1234 = vmatprep.subr.mxu0 0.0
    %1235 = vmatpush1.msra.mxu0 0.0
    %1236 = vmatprep.subr.mxu0 0.0
    %1237 = vmatpush1.msra.mxu0 0.0
    %1238 = vmatprep.subr.mxu0 0.0
    %1239 = vmatpush1.msra.mxu0 0.0
    %1240 = vmatprep.subr.mxu0 0.0
    %1241 = vmatpush1.msra.mxu0 0.0
    %1242 = vmatprep.subr.mxu0 0.0
    %1243 = vmatpush1.msra.mxu0 0.0
    %1244 = vmatprep.subr.mxu0 0.0
    %1245 = vmatpush1.msra.mxu0 0.0
    %1246 = vmatprep.subr.mxu0 0.0
    %1247 = vmatpush1.msra.mxu0 0.0
    %1248 = vmatprep.subr.mxu0 0.0
    %1249 = vmatpush1.msra.mxu0 0.0
    %1250 = vmatprep.subr.mxu0 0.0
    %1251 = vmatpush1.msra.mxu0 0.0
    %1252 = vmatprep.subr.mxu0 0.0
    %1253 = vmatpush1.msra.mxu0 0.0
    %1254 = vmatprep.subr.mxu0 0.0
    %1255 = vmatpush1.msra.mxu0 0.0
    %1256 = vmatprep.subr.mxu0 0.0
    %1257 = vmatpush1.msra.mxu0 0.0
    %1258 = vmatprep.subr.mxu0 0.0
    %1259 = vmatpush1.msra.mxu0 0.0
    %1260 = vmatprep.subr.mxu0 0.0
    %1261 = vmatpush1.msra.mxu0 0.0
    %1262 = vmatprep.subr.mxu0 0.0
    %1263 = vmatpush1.msra.mxu0 0.0
    %1264 = vmatprep.subr.mxu0 0.0
    %1265 = vmatpush1.msra.mxu0 0.0
    %1266 = vmatprep.subr.mxu0 0.0
    %1267 = vmatpush1.msra.mxu0 0.0
    %1268 = vmatprep.subr.mxu0 0.0
    %1269 = vmatpush1.msra.mxu0 0.0
    %1270 = vmatprep.subr.mxu0 0.0
    %1271 = vmatpush1.msra.mxu0 0.0
    %1272 = vmatprep.subr.mxu0 0.0
    %1273 = vmatpush1.msra.mxu0 0.0
    %1274 = vmatprep.subr.mxu0 0.0
    %1275 = vmatpush1.msra.mxu0 0.0
    %1276 = vmatprep.subr.mxu0 0.0
    %1277 = vmatpush1.msra.mxu0 0.0
    %1278 = vmatprep.subr.mxu0 0.0
    %1279 = vmatpush1.msra.mxu0 0.0
    %1280 = vmatprep.subr.mxu0 0.0
    %1281 = vmatpush1.msra.mxu0 0.0
    %1282 = vmatprep.subr.mxu0 0.0
    %1283 = vmatpush1.msra.mxu0 0.0
    %1284 = vmatprep.mubr.f32.mxu0 0.0
    %1285 = vmatmul.mubr.f32.gmra.mrb[0].mxu0 %v1215
    %v1286 = vpop.f32.mrb[0].mxu0
    %v1287 = vadd.f32 %v1207, %v1286
    %v1288 = vpop.f32.mrb[0].mxu0
    %v1289 = vadd.f32 %v1211, %v1288
    %1290 = vmatprep.mubr.f32.mxu0 0.0
    %1291 = vmatmul.mubr.f32.gmra.mrb[0].mxu0 %v1218
    %v1292 = vpop.f32.mrb[0].mxu0
    %v1293 = vadd.f32 %v1207, %v1292
    %v1294 = vpop.f32.mrb[0].mxu0
    %v1295 = vadd.f32 %v1211, %v1294
    %1296 = vdwg.mxu0
    %1299 = vrot.lane.b32.xlu0 %v1287, 96
    %v1300 = vpop.permute.xlu0 %1299
    %1301 = vrot.lane.b32.xlu0 %v1293, 96
    %v1302 = vpop.permute.xlu0 %1301
    %v1303 = vsel %vm203, %v1287, 0
    %v1305 = vsel %vm203, %v1293, 0
    %v1307 = vsel %vm203, %v1300, 0
    %v1309 = vsel %vm203, %v1302, 0
    %1311 = vmatprep.subr.mxu0 0.0
    %1312 = vmatpush1.xpose.msra.mxu0 %v1307
    %1313 = vmatprep.subr.mxu0 0.0
    %1314 = vmatpush1.xpose.msra.mxu0 %v1309
    %1315 = vmatprep.subr.mxu0 0.0
    %1316 = vmatpush1.xpose.msra.mxu0 0.0
    %1317 = vmatprep.subr.mxu0 0.0
    %1318 = vmatpush1.xpose.msra.mxu0 0.0
    %1319 = vmatprep.subr.mxu0 0.0
    %1320 = vmatpush1.xpose.msra.mxu0 0.0
    %1321 = vmatprep.subr.mxu0 0.0
    %1322 = vmatpush1.xpose.msra.mxu0 0.0
    %1323 = vmatprep.subr.mxu0 0.0
    %1324 = vmatpush1.xpose.msra.mxu0 0.0
    %1325 = vmatprep.subr.mxu0 0.0
    %1326 = vmatpush1.xpose.msra.mxu0 0.0
    %1327 = vmatprep.subr.mxu0 0.0
    %1328 = vmatpush1.xpose.msra.mxu0 0.0
    %1329 = vmatprep.subr.mxu0 0.0
    %1330 = vmatpush1.xpose.msra.mxu0 0.0
    %1331 = vmatprep.subr.mxu0 0.0
    %1332 = vmatpush1.xpose.msra.mxu0 0.0
    %1333 = vmatprep.subr.mxu0 0.0
    %1334 = vmatpush1.xpose.msra.mxu0 0.0
    %1335 = vmatprep.subr.mxu0 0.0
    %1336 = vmatpush1.xpose.msra.mxu0 0.0
    %1337 = vmatprep.subr.mxu0 0.0
    %1338 = vmatpush1.xpose.msra.mxu0 0.0
    %1339 = vmatprep.subr.mxu0 0.0
    %1340 = vmatpush1.xpose.msra.mxu0 0.0
    %1341 = vmatprep.subr.mxu0 0.0
    %1342 = vmatpush1.xpose.msra.mxu0 0.0
    %1343 = vmatprep.subr.mxu0 0.0
    %1344 = vmatpush1.xpose.msra.mxu0 0.0
    %1345 = vmatprep.subr.mxu0 0.0
    %1346 = vmatpush1.xpose.msra.mxu0 0.0
    %1347 = vmatprep.subr.mxu0 0.0
    %1348 = vmatpush1.xpose.msra.mxu0 0.0
    %1349 = vmatprep.subr.mxu0 0.0
    %1350 = vmatpush1.xpose.msra.mxu0 0.0
    %1351 = vmatprep.subr.mxu0 0.0
    %1352 = vmatpush1.xpose.msra.mxu0 0.0
    %1353 = vmatprep.subr.mxu0 0.0
    %1354 = vmatpush1.xpose.msra.mxu0 0.0
    %1355 = vmatprep.subr.mxu0 0.0
    %1356 = vmatpush1.xpose.msra.mxu0 0.0
    %1357 = vmatprep.subr.mxu0 0.0
    %1358 = vmatpush1.xpose.msra.mxu0 0.0
    %1359 = vmatprep.subr.mxu0 0.0
    %1360 = vmatpush1.xpose.msra.mxu0 0.0
    %1361 = vmatprep.subr.mxu0 0.0
    %1362 = vmatpush1.xpose.msra.mxu0 0.0
    %1363 = vmatprep.subr.mxu0 0.0
    %1364 = vmatpush1.xpose.msra.mxu0 0.0
    %1365 = vmatprep.subr.mxu0 0.0
    %1366 = vmatpush1.xpose.msra.mxu0 0.0
    %1367 = vmatprep.subr.mxu0 0.0
    %1368 = vmatpush1.xpose.msra.mxu0 0.0
    %1369 = vmatprep.subr.mxu0 0.0
    %1370 = vmatpush1.xpose.msra.mxu0 0.0
    %1371 = vmatprep.subr.mxu0 0.0
    %1372 = vmatpush1.xpose.msra.mxu0 0.0
    %1373 = vmatprep.subr.mxu0 0.0
    %1374 = vmatpush1.xpose.msra.mxu0 0.0
    %1375 = vmatprep.mubr.f32.mxu0 0.0
    %1376 = vmatmul.mubr.f32.gmra.mrb[0].mxu0 %v1303
    %v1377 = vpop.f32.mrb[0].mxu0
    %v1378 = vadd.f32 %v34, %v1377
    %v1379 = vpop.f32.mrb[0].mxu0
    %1380 = vmatprep.mubr.f32.mxu0 0.0
    %1381 = vmatmul.mubr.f32.gmra.mrb[0].mxu0 %v1305
    %v1382 = vpop.f32.mrb[0].mxu0
    %v1383 = vadd.f32 %v35, %v1382
    %v1384 = vpop.f32.mrb[0].mxu0
    %1385 = vdwg.mxu0
    %v1386 = vmul.f32 %v1378, 1.442695
    %v1387 = vpow.pop %v1386
    %v1388 = vmul.f32 %v1383, 1.442695
    %v1389 = vpow.pop %v1388
    %v1390 = vsel %vm291, %v1387, 0.0
    %1391 = vadd.xlane.f32.xlu0 %v1390
    %v1392 = vpop.xlane.xlu0 %1391
    %v1393 = vsel %vm291, %v1389, 0.0
    %1394 = vadd.xlane.f32.xlu0 %v1393
    %v1395 = vpop.xlane.xlu0 %1394
    %v1396 = vrcp.pop %v1392
    %v1397 = vrcp.pop %v1395
    %v1398 = vmul.f32 %v1387, %v1396
    %v1399 = vmul.f32 %v1389, %v1397
    %1400 = vrot.lane.b32.xlu0 %v1287, 120
    %v1401 = vpop.permute.xlu0 %1400
    %1402 = vrot.lane.b32.xlu0 %v1293, 120
    %v1403 = vpop.permute.xlu0 %1402
    %1404 = vrot.lane.b32.xlu0 %v1287, 88
    %v1405 = vpop.permute.xlu0 %1404
    %1406 = vrot.lane.b32.xlu0 %v1293, 88
    %v1407 = vpop.permute.xlu0 %1406
    %v1408 = vsel %vm203, %v1401, 0
    %v1410 = vsel %vm203, %v1403, 0
    %v1412 = vsel %vm203, %v1405, 0
    %v1414 = vsel %vm203, %v1407, 0
    %1416 = vmatprep.subr.mxu0 0.0
    %1417 = vmatpush1.xpose.msra.mxu0 %v1412
    %1418 = vmatprep.subr.mxu0 0.0
    %1419 = vmatpush1.xpose.msra.mxu0 %v1414
    %1420 = vmatprep.subr.mxu0 0.0
    %1421 = vmatpush1.xpose.msra.mxu0 0.0
    %1422 = vmatprep.subr.mxu0 0.0
    %1423 = vmatpush1.xpose.msra.mxu0 0.0
    %1424 = vmatprep.subr.mxu0 0.0
    %1425 = vmatpush1.xpose.msra.mxu0 0.0
    %1426 = vmatprep.subr.mxu0 0.0
    %1427 = vmatpush1.xpose.msra.mxu0 0.0
    %1428 = vmatprep.subr.mxu0 0.0
    %1429 = vmatpush1.xpose.msra.mxu0 0.0
    %1430 = vmatprep.subr.mxu0 0.0
    %1431 = vmatpush1.xpose.msra.mxu0 0.0
    %1432 = vmatprep.subr.mxu0 0.0
    %1433 = vmatpush1.xpose.msra.mxu0 0.0
    %1434 = vmatprep.subr.mxu0 0.0
    %1435 = vmatpush1.xpose.msra.mxu0 0.0
    %1436 = vmatprep.subr.mxu0 0.0
    %1437 = vmatpush1.xpose.msra.mxu0 0.0
    %1438 = vmatprep.subr.mxu0 0.0
    %1439 = vmatpush1.xpose.msra.mxu0 0.0
    %1440 = vmatprep.subr.mxu0 0.0
    %1441 = vmatpush1.xpose.msra.mxu0 0.0
    %1442 = vmatprep.subr.mxu0 0.0
    %1443 = vmatpush1.xpose.msra.mxu0 0.0
    %1444 = vmatprep.subr.mxu0 0.0
    %1445 = vmatpush1.xpose.msra.mxu0 0.0
    %1446 = vmatprep.subr.mxu0 0.0
    %1447 = vmatpush1.xpose.msra.mxu0 0.0
    %1448 = vmatprep.subr.mxu0 0.0
    %1449 = vmatpush1.xpose.msra.mxu0 0.0
    %1450 = vmatprep.subr.mxu0 0.0
    %1451 = vmatpush1.xpose.msra.mxu0 0.0
    %1452 = vmatprep.subr.mxu0 0.0
    %1453 = vmatpush1.xpose.msra.mxu0 0.0
    %1454 = vmatprep.subr.mxu0 0.0
    %1455 = vmatpush1.xpose.msra.mxu0 0.0
    %1456 = vmatprep.subr.mxu0 0.0
    %1457 = vmatpush1.xpose.msra.mxu0 0.0
    %1458 = vmatprep.subr.mxu0 0.0
    %1459 = vmatpush1.xpose.msra.mxu0 0.0
    %1460 = vmatprep.subr.mxu0 0.0
    %1461 = vmatpush1.xpose.msra.mxu0 0.0
    %1462 = vmatprep.subr.mxu0 0.0
    %1463 = vmatpush1.xpose.msra.mxu0 0.0
    %1464 = vmatprep.subr.mxu0 0.0
    %1465 = vmatpush1.xpose.msra.mxu0 0.0
    %1466 = vmatprep.subr.mxu0 0.0
    %1467 = vmatpush1.xpose.msra.mxu0 0.0
    %1468 = vmatprep.subr.mxu0 0.0
    %1469 = vmatpush1.xpose.msra.mxu0 0.0
    %1470 = vmatprep.subr.mxu0 0.0
    %1471 = vmatpush1.xpose.msra.mxu0 0.0
    %1472 = vmatprep.subr.mxu0 0.0
    %1473 = vmatpush1.xpose.msra.mxu0 0.0
    %1474 = vmatprep.subr.mxu0 0.0
    %1475 = vmatpush1.xpose.msra.mxu0 0.0
    %1476 = vmatprep.subr.mxu0 0.0
    %1477 = vmatpush1.xpose.msra.mxu0 0.0
    %1478 = vmatprep.subr.mxu0 0.0
    %1479 = vmatpush1.xpose.msra.mxu0 0.0
    %1480 = vmatprep.mubr.f32.mxu0 0.0
    %1481 = vmatmul.mubr.f32.gmra.mrb[0].mxu0 %v1408
    %v1482 = vpop.f32.mrb[0].mxu0
    %v1483 = vadd.f32 %v34, %v1482
    %v1484 = vpop.f32.mrb[0].mxu0
    %1485 = vmatprep.mubr.f32.mxu0 0.0
    %1486 = vmatmul.mubr.f32.gmra.mrb[0].mxu0 %v1410
    %v1487 = vpop.f32.mrb[0].mxu0
    %v1488 = vadd.f32 %v35, %v1487
    %v1489 = vpop.f32.mrb[0].mxu0
    %1490 = vdwg.mxu0
    %v1491 = vmul.f32 %v1483, 1.442695
    %v1492 = vpow.pop %v1491
    %v1493 = vmul.f32 %v1488, 1.442695
    %v1494 = vpow.pop %v1493
    %v1495 = vsel %vm291, %v1492, 0.0
    %1496 = vadd.xlane.f32.xlu0 %v1495
    %v1497 = vpop.xlane.xlu0 %1496
    %v1498 = vsel %vm291, %v1494, 0.0
    %1499 = vadd.xlane.f32.xlu0 %v1498
    %v1500 = vpop.xlane.xlu0 %1499
    %v1501 = vrcp.pop %v1497
    %v1502 = vrcp.pop %v1500
    %v1503 = vmul.f32 %v1492, %v1501
    %v1504 = vmul.f32 %v1494, %v1502
    %1505 = vrot.lane.b32.xlu0 %v1287, 32
    %v1506 = vpop.permute.xlu0 %1505
    %1507 = vrot.lane.b32.xlu0 %v1293, 32
    %v1508 = vpop.permute.xlu0 %1507
    %v1512 = vsel %vm291, %v1503, 0
    %v1515 = vsel %vm291, %v1504, 0
    %1517 = vmatprep.subr.mxu0 0.0
    %1518 = vmatpush1.msra.mxu0 %v1506
    %1519 = vmatprep.subr.mxu0 0.0
    %1520 = vmatpush1.msra.mxu0 %v1508
    %1521 = vmatprep.subr.mxu0 0.0
    %1522 = vmatpush1.msra.mxu0 0.0
    %1523 = vmatprep.subr.mxu0 0.0
    %1524 = vmatpush1.msra.mxu0 0.0
    %1525 = vmatprep.subr.mxu0 0.0
    %1526 = vmatpush1.msra.mxu0 0.0
    %1527 = vmatprep.subr.mxu0 0.0
    %1528 = vmatpush1.msra.mxu0 0.0
    %1529 = vmatprep.subr.mxu0 0.0
    %1530 = vmatpush1.msra.mxu0 0.0
    %1531 = vmatprep.subr.mxu0 0.0
    %1532 = vmatpush1.msra.mxu0 0.0
    %1533 = vmatprep.subr.mxu0 0.0
    %1534 = vmatpush1.msra.mxu0 0.0
    %1535 = vmatprep.subr.mxu0 0.0
    %1536 = vmatpush1.msra.mxu0 0.0
    %1537 = vmatprep.subr.mxu0 0.0
    %1538 = vmatpush1.msra.mxu0 0.0
    %1539 = vmatprep.subr.mxu0 0.0
    %1540 = vmatpush1.msra.mxu0 0.0
    %1541 = vmatprep.subr.mxu0 0.0
    %1542 = vmatpush1.msra.mxu0 0.0
    %1543 = vmatprep.subr.mxu0 0.0
    %1544 = vmatpush1.msra.mxu0 0.0
    %1545 = vmatprep.subr.mxu0 0.0
    %1546 = vmatpush1.msra.mxu0 0.0
    %1547 = vmatprep.subr.mxu0 0.0
    %1548 = vmatpush1.msra.mxu0 0.0
    %1549 = vmatprep.subr.mxu0 0.0
    %1550 = vmatpush1.msra.mxu0 0.0
    %1551 = vmatprep.subr.mxu0 0.0
    %1552 = vmatpush1.msra.mxu0 0.0
    %1553 = vmatprep.subr.mxu0 0.0
    %1554 = vmatpush1.msra.mxu0 0.0
    %1555 = vmatprep.subr.mxu0 0.0
    %1556 = vmatpush1.msra.mxu0 0.0
    %1557 = vmatprep.subr.mxu0 0.0
    %1558 = vmatpush1.msra.mxu0 0.0
    %1559 = vmatprep.subr.mxu0 0.0
    %1560 = vmatpush1.msra.mxu0 0.0
    %1561 = vmatprep.subr.mxu0 0.0
    %1562 = vmatpush1.msra.mxu0 0.0
    %1563 = vmatprep.subr.mxu0 0.0
    %1564 = vmatpush1.msra.mxu0 0.0
    %1565 = vmatprep.subr.mxu0 0.0
    %1566 = vmatpush1.msra.mxu0 0.0
    %1567 = vmatprep.subr.mxu0 0.0
    %1568 = vmatpush1.msra.mxu0 0.0
    %1569 = vmatprep.subr.mxu0 0.0
    %1570 = vmatpush1.msra.mxu0 0.0
    %1571 = vmatprep.subr.mxu0 0.0
    %1572 = vmatpush1.msra.mxu0 0.0
    %1573 = vmatprep.subr.mxu0 0.0
    %1574 = vmatpush1.msra.mxu0 0.0
    %1575 = vmatprep.subr.mxu0 0.0
    %1576 = vmatpush1.msra.mxu0 0.0
    %1577 = vmatprep.subr.mxu0 0.0
    %1578 = vmatpush1.msra.mxu0 0.0
    %1579 = vmatprep.subr.mxu0 0.0
    %1580 = vmatpush1.msra.mxu0 0.0
    %1581 = vmatprep.mubr.f32.mxu0 0.0
    %1582 = vmatmul.mubr.f32.gmra.mrb[0].mxu0 %v1512
    %v1583 = vpop.f32.mrb[0].mxu0
    %v1584 = vadd.f32 0.0, %v1583
    %v1585 = vpop.f32.mrb[0].mxu0
    %1586 = vmatprep.mubr.f32.mxu0 0.0
    %1587 = vmatmul.mubr.f32.gmra.mrb[0].mxu0 %v1515
    %v1588 = vpop.f32.mrb[0].mxu0
    %v1589 = vadd.f32 0.0, %v1588
    %v1590 = vpop.f32.mrb[0].mxu0
    %1591 = vdwg.mxu0
    %1592 = vrot.lane.b32.xlu0 %v1287, 64
    %v1593 = vpop.permute.xlu0 %1592
    %1594 = vrot.lane.b32.xlu0 %v1293, 64
    %v1595 = vpop.permute.xlu0 %1594
    %v1599 = vsel %vm291, %v1398, 0
    %v1602 = vsel %vm291, %v1399, 0
    %1604 = vmatprep.subr.mxu0 0.0
    %1605 = vmatpush1.msra.mxu0 %v1593
    %1606 = vmatprep.subr.mxu0 0.0
    %1607 = vmatpush1.msra.mxu0 %v1595
    %1608 = vmatprep.subr.mxu0 0.0
    %1609 = vmatpush1.msra.mxu0 0.0
    %1610 = vmatprep.subr.mxu0 0.0
    %1611 = vmatpush1.msra.mxu0 0.0
    %1612 = vmatprep.subr.mxu0 0.0
    %1613 = vmatpush1.msra.mxu0 0.0
    %1614 = vmatprep.subr.mxu0 0.0
    %1615 = vmatpush1.msra.mxu0 0.0
    %1616 = vmatprep.subr.mxu0 0.0
    %1617 = vmatpush1.msra.mxu0 0.0
    %1618 = vmatprep.subr.mxu0 0.0
    %1619 = vmatpush1.msra.mxu0 0.0
    %1620 = vmatprep.subr.mxu0 0.0
    %1621 = vmatpush1.msra.mxu0 0.0
    %1622 = vmatprep.subr.mxu0 0.0
    %1623 = vmatpush1.msra.mxu0 0.0
    %1624 = vmatprep.subr.mxu0 0.0
    %1625 = vmatpush1.msra.mxu0 0.0
    %1626 = vmatprep.subr.mxu0 0.0
    %1627 = vmatpush1.msra.mxu0 0.0
    %1628 = vmatprep.subr.mxu0 0.0
    %1629 = vmatpush1.msra.mxu0 0.0
    %1630 = vmatprep.subr.mxu0 0.0
    %1631 = vmatpush1.msra.mxu0 0.0
    %1632 = vmatprep.subr.mxu0 0.0
    %1633 = vmatpush1.msra.mxu0 0.0
    %1634 = vmatprep.subr.mxu0 0.0
    %1635 = vmatpush1.msra.mxu0 0.0
    %1636 = vmatprep.subr.mxu0 0.0
    %1637 = vmatpush1.msra.mxu0 0.0
    %1638 = vmatprep.subr.mxu0 0.0
    %1639 = vmatpush1.msra.mxu0 0.0
    %1640 = vmatprep.subr.mxu0 0.0
    %1641 = vmatpush1.msra.mxu0 0.0
    %1642 = vmatprep.subr.mxu0 0.0
    %1643 = vmatpush1.msra.mxu0 0.0
    %1644 = vmatprep.subr.mxu0 0.0
    %1645 = vmatpush1.msra.mxu0 0.0
    %1646 = vmatprep.subr.mxu0 0.0
    %1647 = vmatpush1.msra.mxu0 0.0
    %1648 = vmatprep.subr.mxu0 0.0
    %1649 = vmatpush1.msra.mxu0 0.0
    %1650 = vmatprep.subr.mxu0 0.0
    %1651 = vmatpush1.msra.mxu0 0.0
    %1652 = vmatprep.subr.mxu0 0.0
    %1653 = vmatpush1.msra.mxu0 0.0
    %1654 = vmatprep.subr.mxu0 0.0
    %1655 = vmatpush1.msra.mxu0 0.0
    %1656 = vmatprep.subr.mxu0 0.0
    %1657 = vmatpush1.msra.mxu0 0.0
    %1658 = vmatprep.subr.mxu0 0.0
    %1659 = vmatpush1.msra.mxu0 0.0
    %1660 = vmatprep.subr.mxu0 0.0
    %1661 = vmatpush1.msra.mxu0 0.0
    %1662 = vmatprep.subr.mxu0 0.0
    %1663 = vmatpush1.msra.mxu0 0.0
    %1664 = vmatprep.subr.mxu0 0.0
    %1665 = vmatpush1.msra.mxu0 0.0
    %1666 = vmatprep.subr.mxu0 0.0
    %1667 = vmatpush1.msra.mxu0 0.0
    %1668 = vmatprep.mubr.f32.mxu0 0.0
    %1669 = vmatmul.mubr.f32.gmra.mrb[0].mxu0 %v1599
    %v1670 = vpop.f32.mrb[0].mxu0
    %v1671 = vadd.f32 %v1584, %v1670
    %v1672 = vpop.f32.mrb[0].mxu0
    %1673 = vmatprep.mubr.f32.mxu0 0.0
    %1674 = vmatmul.mubr.f32.gmra.mrb[0].mxu0 %v1602
    %v1675 = vpop.f32.mrb[0].mxu0
    %v1676 = vadd.f32 %v1589, %v1675
    %v1677 = vpop.f32.mrb[0].mxu0
    %1678 = vdwg.mxu0
    %1679 = vrot.lane.b32.xlu0 %v1287, 112
    %v1680 = vpop.permute.xlu0 %1679
    %1681 = vrot.lane.b32.xlu0 %v1293, 112
    %v1682 = vpop.permute.xlu0 %1681
    %1683 = vrot.lane.b32.xlu0 %v1287, 80
    %v1684 = vpop.permute.xlu0 %1683
    %1685 = vrot.lane.b32.xlu0 %v1293, 80
    %v1686 = vpop.permute.xlu0 %1685
    %v1687 = vsel %vm203, %v1680, 0
    %v1689 = vsel %vm203, %v1682, 0
    %v1691 = vsel %vm203, %v1684, 0
    %v1693 = vsel %vm203, %v1686, 0
    %1695 = vmatprep.subr.mxu0 0.0
    %1696 = vmatpush1.xpose.msra.mxu0 %v1691
    %1697 = vmatprep.subr.mxu0 0.0
    %1698 = vmatpush1.xpose.msra.mxu0 %v1693
    %1699 = vmatprep.subr.mxu0 0.0
    %1700 = vmatpush1.xpose.msra.mxu0 0.0
    %1701 = vmatprep.subr.mxu0 0.0
    %1702 = vmatpush1.xpose.msra.mxu0 0.0
    %1703 = vmatprep.subr.mxu0 0.0
    %1704 = vmatpush1.xpose.msra.mxu0 0.0
    %1705 = vmatprep.subr.mxu0 0.0
    %1706 = vmatpush1.xpose.msra.mxu0 0.0
    %1707 = vmatprep.subr.mxu0 0.0
    %1708 = vmatpush1.xpose.msra.mxu0 0.0
    %1709 = vmatprep.subr.mxu0 0.0
    %1710 = vmatpush1.xpose.msra.mxu0 0.0
    %1711 = vmatprep.subr.mxu0 0.0
    %1712 = vmatpush1.xpose.msra.mxu0 0.0
    %1713 = vmatprep.subr.mxu0 0.0
    %1714 = vmatpush1.xpose.msra.mxu0 0.0
    %1715 = vmatprep.subr.mxu0 0.0
    %1716 = vmatpush1.xpose.msra.mxu0 0.0
    %1717 = vmatprep.subr.mxu0 0.0
    %1718 = vmatpush1.xpose.msra.mxu0 0.0
    %1719 = vmatprep.subr.mxu0 0.0
    %1720 = vmatpush1.xpose.msra.mxu0 0.0
    %1721 = vmatprep.subr.mxu0 0.0
    %1722 = vmatpush1.xpose.msra.mxu0 0.0
    %1723 = vmatprep.subr.mxu0 0.0
    %1724 = vmatpush1.xpose.msra.mxu0 0.0
    %1725 = vmatprep.subr.mxu0 0.0
    %1726 = vmatpush1.xpose.msra.mxu0 0.0
    %1727 = vmatprep.subr.mxu0 0.0
    %1728 = vmatpush1.xpose.msra.mxu0 0.0
    %1729 = vmatprep.subr.mxu0 0.0
    %1730 = vmatpush1.xpose.msra.mxu0 0.0
    %1731 = vmatprep.subr.mxu0 0.0
    %1732 = vmatpush1.xpose.msra.mxu0 0.0
    %1733 = vmatprep.subr.mxu0 0.0
    %1734 = vmatpush1.xpose.msra.mxu0 0.0
    %1735 = vmatprep.subr.mxu0 0.0
    %1736 = vmatpush1.xpose.msra.mxu0 0.0
    %1737 = vmatprep.subr.mxu0 0.0
    %1738 = vmatpush1.xpose.msra.mxu0 0.0
    %1739 = vmatprep.subr.mxu0 0.0
    %1740 = vmatpush1.xpose.msra.mxu0 0.0
    %1741 = vmatprep.subr.mxu0 0.0
    %1742 = vmatpush1.xpose.msra.mxu0 0.0
    %1743 = vmatprep.subr.mxu0 0.0
    %1744 = vmatpush1.xpose.msra.mxu0 0.0
    %1745 = vmatprep.subr.mxu0 0.0
    %1746 = vmatpush1.xpose.msra.mxu0 0.0
    %1747 = vmatprep.subr.mxu0 0.0
    %1748 = vmatpush1.xpose.msra.mxu0 0.0
    %1749 = vmatprep.subr.mxu0 0.0
    %1750 = vmatpush1.xpose.msra.mxu0 0.0
    %1751 = vmatprep.subr.mxu0 0.0
    %1752 = vmatpush1.xpose.msra.mxu0 0.0
    %1753 = vmatprep.subr.mxu0 0.0
    %1754 = vmatpush1.xpose.msra.mxu0 0.0
    %1755 = vmatprep.subr.mxu0 0.0
    %1756 = vmatpush1.xpose.msra.mxu0 0.0
    %1757 = vmatprep.subr.mxu0 0.0
    %1758 = vmatpush1.xpose.msra.mxu0 0.0
    %1759 = vmatprep.mubr.f32.mxu0 0.0
    %1760 = vmatmul.mubr.f32.gmra.mrb[0].mxu0 %v1687
    %v1761 = vpop.f32.mrb[0].mxu0
    %v1762 = vadd.f32 %v34, %v1761
    %v1763 = vpop.f32.mrb[0].mxu0
    %1764 = vmatprep.mubr.f32.mxu0 0.0
    %1765 = vmatmul.mubr.f32.gmra.mrb[0].mxu0 %v1689
    %v1766 = vpop.f32.mrb[0].mxu0
    %v1767 = vadd.f32 %v35, %v1766
    %v1768 = vpop.f32.mrb[0].mxu0
    %1769 = vdwg.mxu0
    %v1770 = vmul.f32 %v1762, 1.442695
    %v1771 = vpow.pop %v1770
    %v1772 = vmul.f32 %v1767, 1.442695
    %v1773 = vpow.pop %v1772
    %v1774 = vsel %vm291, %v1771, 0.0
    %1775 = vadd.xlane.f32.xlu0 %v1774
    %v1776 = vpop.xlane.xlu0 %1775
    %v1777 = vsel %vm291, %v1773, 0.0
    %1778 = vadd.xlane.f32.xlu0 %v1777
    %v1779 = vpop.xlane.xlu0 %1778
    %v1780 = vrcp.pop %v1776
    %v1781 = vrcp.pop %v1779
    %v1782 = vmul.f32 %v1771, %v1780
    %v1783 = vmul.f32 %v1773, %v1781
    %v1785 = vsel %vm291, %v1782, 0
    %v1788 = vsel %vm291, %v1783, 0
    %1790 = vmatprep.subr.mxu0 0.0
    %1791 = vmatpush1.msra.mxu0 %v1289
    %1792 = vmatprep.subr.mxu0 0.0
    %1793 = vmatpush1.msra.mxu0 %v1295
    %1794 = vmatprep.subr.mxu0 0.0
    %1795 = vmatpush1.msra.mxu0 0.0
    %1796 = vmatprep.subr.mxu0 0.0
    %1797 = vmatpush1.msra.mxu0 0.0
    %1798 = vmatprep.subr.mxu0 0.0
    %1799 = vmatpush1.msra.mxu0 0.0
    %1800 = vmatprep.subr.mxu0 0.0
    %1801 = vmatpush1.msra.mxu0 0.0
    %1802 = vmatprep.subr.mxu0 0.0
    %1803 = vmatpush1.msra.mxu0 0.0
    %1804 = vmatprep.subr.mxu0 0.0
    %1805 = vmatpush1.msra.mxu0 0.0
    %1806 = vmatprep.subr.mxu0 0.0
    %1807 = vmatpush1.msra.mxu0 0.0
    %1808 = vmatprep.subr.mxu0 0.0
    %1809 = vmatpush1.msra.mxu0 0.0
    %1810 = vmatprep.subr.mxu0 0.0
    %1811 = vmatpush1.msra.mxu0 0.0
    %1812 = vmatprep.subr.mxu0 0.0
    %1813 = vmatpush1.msra.mxu0 0.0
    %1814 = vmatprep.subr.mxu0 0.0
    %1815 = vmatpush1.msra.mxu0 0.0
    %1816 = vmatprep.subr.mxu0 0.0
    %1817 = vmatpush1.msra.mxu0 0.0
    %1818 = vmatprep.subr.mxu0 0.0
    %1819 = vmatpush1.msra.mxu0 0.0
    %1820 = vmatprep.subr.mxu0 0.0
    %1821 = vmatpush1.msra.mxu0 0.0
    %1822 = vmatprep.subr.mxu0 0.0
    %1823 = vmatpush1.msra.mxu0 0.0
    %1824 = vmatprep.subr.mxu0 0.0
    %1825 = vmatpush1.msra.mxu0 0.0
    %1826 = vmatprep.subr.mxu0 0.0
    %1827 = vmatpush1.msra.mxu0 0.0
    %1828 = vmatprep.subr.mxu0 0.0
    %1829 = vmatpush1.msra.mxu0 0.0
    %1830 = vmatprep.subr.mxu0 0.0
    %1831 = vmatpush1.msra.mxu0 0.0
    %1832 = vmatprep.subr.mxu0 0.0
    %1833 = vmatpush1.msra.mxu0 0.0
    %1834 = vmatprep.subr.mxu0 0.0
    %1835 = vmatpush1.msra.mxu0 0.0
    %1836 = vmatprep.subr.mxu0 0.0
    %1837 = vmatpush1.msra.mxu0 0.0
    %1838 = vmatprep.subr.mxu0 0.0
    %1839 = vmatpush1.msra.mxu0 0.0
    %1840 = vmatprep.subr.mxu0 0.0
    %1841 = vmatpush1.msra.mxu0 0.0
    %1842 = vmatprep.subr.mxu0 0.0
    %1843 = vmatpush1.msra.mxu0 0.0
    %1844 = vmatprep.subr.mxu0 0.0
    %1845 = vmatpush1.msra.mxu0 0.0
    %1846 = vmatprep.subr.mxu0 0.0
    %1847 = vmatpush1.msra.mxu0 0.0
    %1848 = vmatprep.subr.mxu0 0.0
    %1849 = vmatpush1.msra.mxu0 0.0
    %1850 = vmatprep.subr.mxu0 0.0
    %1851 = vmatpush1.msra.mxu0 0.0
    %1852 = vmatprep.subr.mxu0 0.0
    %1853 = vmatpush1.msra.mxu0 0.0
    %1854 = vmatprep.mubr.f32.mxu0 0.0
    %1855 = vmatmul.mubr.f32.gmra.mrb[0].mxu0 %v1785
    %v1856 = vpop.f32.mrb[0].mxu0
    %v1857 = vadd.f32 0.0, %v1856
    %v1858 = vpop.f32.mrb[0].mxu0
    %1859 = vmatprep.mubr.f32.mxu0 0.0
    %1860 = vmatmul.mubr.f32.gmra.mrb[0].mxu0 %v1788
    %v1861 = vpop.f32.mrb[0].mxu0
    %v1862 = vadd.f32 0.0, %v1861
    %v1863 = vpop.f32.mrb[0].mxu0
    %1864 = vdwg.mxu0
    %v1865 = vadd.f32 %v1671, %v1857
    %v1866 = vadd.f32 %v1676, %v1862
    %1867 = vrot.lane.b32.xlu0 %v1287, 104
    %v1868 = vpop.permute.xlu0 %1867
    %1869 = vrot.lane.b32.xlu0 %v1293, 104
    %v1870 = vpop.permute.xlu0 %1869
    %1871 = vrot.lane.b32.xlu0 %v1287, 72
    %v1872 = vpop.permute.xlu0 %1871
    %1873 = vrot.lane.b32.xlu0 %v1293, 72
    %v1874 = vpop.permute.xlu0 %1873
    %v1875 = vsel %vm203, %v1868, 0
    %v1877 = vsel %vm203, %v1870, 0
    %v1879 = vsel %vm203, %v1872, 0
    %v1881 = vsel %vm203, %v1874, 0
    %1883 = vmatprep.subr.mxu0 0.0
    %1884 = vmatpush1.xpose.msra.mxu0 %v1879
    %1885 = vmatprep.subr.mxu0 0.0
    %1886 = vmatpush1.xpose.msra.mxu0 %v1881
    %1887 = vmatprep.subr.mxu0 0.0
    %1888 = vmatpush1.xpose.msra.mxu0 0.0
    %1889 = vmatprep.subr.mxu0 0.0
    %1890 = vmatpush1.xpose.msra.mxu0 0.0
    %1891 = vmatprep.subr.mxu0 0.0
    %1892 = vmatpush1.xpose.msra.mxu0 0.0
    %1893 = vmatprep.subr.mxu0 0.0
    %1894 = vmatpush1.xpose.msra.mxu0 0.0
    %1895 = vmatprep.subr.mxu0 0.0
    %1896 = vmatpush1.xpose.msra.mxu0 0.0
    %1897 = vmatprep.subr.mxu0 0.0
    %1898 = vmatpush1.xpose.msra.mxu0 0.0
    %1899 = vmatprep.subr.mxu0 0.0
    %1900 = vmatpush1.xpose.msra.mxu0 0.0
    %1901 = vmatprep.subr.mxu0 0.0
    %1902 = vmatpush1.xpose.msra.mxu0 0.0
    %1903 = vmatprep.subr.mxu0 0.0
    %1904 = vmatpush1.xpose.msra.mxu0 0.0
    %1905 = vmatprep.subr.mxu0 0.0
    %1906 = vmatpush1.xpose.msra.mxu0 0.0
    %1907 = vmatprep.subr.mxu0 0.0
    %1908 = vmatpush1.xpose.msra.mxu0 0.0
    %1909 = vmatprep.subr.mxu0 0.0
    %1910 = vmatpush1.xpose.msra.mxu0 0.0
    %1911 = vmatprep.subr.mxu0 0.0
    %1912 = vmatpush1.xpose.msra.mxu0 0.0
    %1913 = vmatprep.subr.mxu0 0.0
    %1914 = vmatpush1.xpose.msra.mxu0 0.0
    %1915 = vmatprep.subr.mxu0 0.0
    %1916 = vmatpush1.xpose.msra.mxu0 0.0
    %1917 = vmatprep.subr.mxu0 0.0
    %1918 = vmatpush1.xpose.msra.mxu0 0.0
    %1919 = vmatprep.subr.mxu0 0.0
    %1920 = vmatpush1.xpose.msra.mxu0 0.0
    %1921 = vmatprep.subr.mxu0 0.0
    %1922 = vmatpush1.xpose.msra.mxu0 0.0
    %1923 = vmatprep.subr.mxu0 0.0
    %1924 = vmatpush1.xpose.msra.mxu0 0.0
    %1925 = vmatprep.subr.mxu0 0.0
    %1926 = vmatpush1.xpose.msra.mxu0 0.0
    %1927 = vmatprep.subr.mxu0 0.0
    %1928 = vmatpush1.xpose.msra.mxu0 0.0
    %1929 = vmatprep.subr.mxu0 0.0
    %1930 = vmatpush1.xpose.msra.mxu0 0.0
    %1931 = vmatprep.subr.mxu0 0.0
    %1932 = vmatpush1.xpose.msra.mxu0 0.0
    %1933 = vmatprep.subr.mxu0 0.0
    %1934 = vmatpush1.xpose.msra.mxu0 0.0
    %1935 = vmatprep.subr.mxu0 0.0
    %1936 = vmatpush1.xpose.msra.mxu0 0.0
    %1937 = vmatprep.subr.mxu0 0.0
    %1938 = vmatpush1.xpose.msra.mxu0 0.0
    %1939 = vmatprep.subr.mxu0 0.0
    %1940 = vmatpush1.xpose.msra.mxu0 0.0
    %1941 = vmatprep.subr.mxu0 0.0
    %1942 = vmatpush1.xpose.msra.mxu0 0.0
    %1943 = vmatprep.subr.mxu0 0.0
    %1944 = vmatpush1.xpose.msra.mxu0 0.0
    %1945 = vmatprep.subr.mxu0 0.0
    %1946 = vmatpush1.xpose.msra.mxu0 0.0
    %1947 = vmatprep.mubr.f32.mxu0 0.0
    %1948 = vmatmul.mubr.f32.gmra.mrb[0].mxu0 %v1875
    %v1949 = vpop.f32.mrb[0].mxu0
    %v1950 = vadd.f32 %v34, %v1949
    %v1951 = vpop.f32.mrb[0].mxu0
    %1952 = vmatprep.mubr.f32.mxu0 0.0
    %1953 = vmatmul.mubr.f32.gmra.mrb[0].mxu0 %v1877
    %v1954 = vpop.f32.mrb[0].mxu0
    %v1955 = vadd.f32 %v35, %v1954
    %v1956 = vpop.f32.mrb[0].mxu0
    %1957 = vdwg.mxu0
    %v1958 = vmul.f32 %v1950, 1.442695
    %v1959 = vpow.pop %v1958
    %v1960 = vmul.f32 %v1955, 1.442695
    %v1961 = vpow.pop %v1960
    %v1962 = vsel %vm291, %v1959, 0.0
    %1963 = vadd.xlane.f32.xlu0 %v1962
    %v1964 = vpop.xlane.xlu0 %1963
    %v1965 = vsel %vm291, %v1961, 0.0
    %1966 = vadd.xlane.f32.xlu0 %v1965
    %v1967 = vpop.xlane.xlu0 %1966
    %v1968 = vrcp.pop %v1964
    %v1969 = vrcp.pop %v1967
    %v1970 = vmul.f32 %v1959, %v1968
    %v1971 = vmul.f32 %v1961, %v1969
    %1974 = vrot.lane.b32.xlu0 %v1289, 96
    %v1975 = vpop.permute.xlu0 %1974
    %1976 = vrot.lane.b32.xlu0 %v1295, 96
    %v1977 = vpop.permute.xlu0 %1976
    %v1981 = vsel %vm291, %v1970, 0
    %v1984 = vsel %vm291, %v1971, 0
    %1986 = vmatprep.subr.mxu0 0.0
    %1987 = vmatpush1.msra.mxu0 %v1975
    %1988 = vmatprep.subr.mxu0 0.0
    %1989 = vmatpush1.msra.mxu0 %v1977
    %1990 = vmatprep.subr.mxu0 0.0
    %1991 = vmatpush1.msra.mxu0 0.0
    %1992 = vmatprep.subr.mxu0 0.0
    %1993 = vmatpush1.msra.mxu0 0.0
    %1994 = vmatprep.subr.mxu0 0.0
    %1995 = vmatpush1.msra.mxu0 0.0
    %1996 = vmatprep.subr.mxu0 0.0
    %1997 = vmatpush1.msra.mxu0 0.0
    %1998 = vmatprep.subr.mxu0 0.0
    %1999 = vmatpush1.msra.mxu0 0.0
    %2000 = vmatprep.subr.mxu0 0.0
    %2001 = vmatpush1.msra.mxu0 0.0
    %2002 = vmatprep.subr.mxu0 0.0
    %2003 = vmatpush1.msra.mxu0 0.0
    %2004 = vmatprep.subr.mxu0 0.0
    %2005 = vmatpush1.msra.mxu0 0.0
    %2006 = vmatprep.subr.mxu0 0.0
    %2007 = vmatpush1.msra.mxu0 0.0
    %2008 = vmatprep.subr.mxu0 0.0
    %2009 = vmatpush1.msra.mxu0 0.0
    %2010 = vmatprep.subr.mxu0 0.0
    %2011 = vmatpush1.msra.mxu0 0.0
    %2012 = vmatprep.subr.mxu0 0.0
    %2013 = vmatpush1.msra.mxu0 0.0
    %2014 = vmatprep.subr.mxu0 0.0
    %2015 = vmatpush1.msra.mxu0 0.0
    %2016 = vmatprep.subr.mxu0 0.0
    %2017 = vmatpush1.msra.mxu0 0.0
    %2018 = vmatprep.subr.mxu0 0.0
    %2019 = vmatpush1.msra.mxu0 0.0
    %2020 = vmatprep.subr.mxu0 0.0
    %2021 = vmatpush1.msra.mxu0 0.0
    %2022 = vmatprep.subr.mxu0 0.0
    %2023 = vmatpush1.msra.mxu0 0.0
    %2024 = vmatprep.subr.mxu0 0.0
    %2025 = vmatpush1.msra.mxu0 0.0
    %2026 = vmatprep.subr.mxu0 0.0
    %2027 = vmatpush1.msra.mxu0 0.0
    %2028 = vmatprep.subr.mxu0 0.0
    %2029 = vmatpush1.msra.mxu0 0.0
    %2030 = vmatprep.subr.mxu0 0.0
    %2031 = vmatpush1.msra.mxu0 0.0
    %2032 = vmatprep.subr.mxu0 0.0
    %2033 = vmatpush1.msra.mxu0 0.0
    %2034 = vmatprep.subr.mxu0 0.0
    %2035 = vmatpush1.msra.mxu0 0.0
    %2036 = vmatprep.subr.mxu0 0.0
    %2037 = vmatpush1.msra.mxu0 0.0
    %2038 = vmatprep.subr.mxu0 0.0
    %2039 = vmatpush1.msra.mxu0 0.0
    %2040 = vmatprep.subr.mxu0 0.0
    %2041 = vmatpush1.msra.mxu0 0.0
    %2042 = vmatprep.subr.mxu0 0.0
    %2043 = vmatpush1.msra.mxu0 0.0
    %2044 = vmatprep.subr.mxu0 0.0
    %2045 = vmatpush1.msra.mxu0 0.0
    %2046 = vmatprep.subr.mxu0 0.0
    %2047 = vmatpush1.msra.mxu0 0.0
    %2048 = vmatprep.subr.mxu0 0.0
    %2049 = vmatpush1.msra.mxu0 0.0
    %2050 = vmatprep.mubr.f32.mxu0 0.0
    %2051 = vmatmul.mubr.f32.gmra.mrb[0].mxu0 %v1981
    %v2052 = vpop.f32.mrb[0].mxu0
    %v2053 = vadd.f32 0.0, %v2052
    %v2054 = vpop.f32.mrb[0].mxu0
    %2055 = vmatprep.mubr.f32.mxu0 0.0
    %2056 = vmatmul.mubr.f32.gmra.mrb[0].mxu0 %v1984
    %v2057 = vpop.f32.mrb[0].mxu0
    %v2058 = vadd.f32 0.0, %v2057
    %v2059 = vpop.f32.mrb[0].mxu0
    %2060 = vdwg.mxu0
    %v2061 = vadd.f32 %v1865, %v2053
    %v2062 = vadd.f32 %v1866, %v2058
    %v2063 = vadd.f32 %v1150, %v2061
    %v2064 = vadd.f32 %v1151, %v2062
    %v2065 = vlaneseq
    %v2066 = vshrl.u32 %v2065, 7
    %v2067 = vsub.s32 0, %v2066
    %v2068 = vrot.slane %v1154, %v2067
    %v2069 = vadd.f32 %v2063, %v2068
    %v2070 = vadd.f32 %v2064, %v2068
    %v2072 = vsel %vm53, %v2069, 0
    %v2075 = vsel %vm53, %v2070, 0
    %2077 = vmatprep.subr.mxu0 0.0
    %2078 = vmatpush1.msra.mxu0 %v36
    %2079 = vmatprep.subr.mxu0 0.0
    %2080 = vmatpush1.msra.mxu0 %v37
    %2081 = vmatprep.subr.mxu0 0.0
    %2082 = vmatpush1.msra.mxu0 %v38
    %2083 = vmatprep.subr.mxu0 0.0
    %2084 = vmatpush1.msra.mxu0 %v39
    %2085 = vmatprep.subr.mxu0 0.0
    %2086 = vmatpush1.msra.mxu0 0.0
    %2087 = vmatprep.subr.mxu0 0.0
    %2088 = vmatpush1.msra.mxu0 0.0
    %2089 = vmatprep.subr.mxu0 0.0
    %2090 = vmatpush1.msra.mxu0 0.0
    %2091 = vmatprep.subr.mxu0 0.0
    %2092 = vmatpush1.msra.mxu0 0.0
    %2093 = vmatprep.subr.mxu0 0.0
    %2094 = vmatpush1.msra.mxu0 0.0
    %2095 = vmatprep.subr.mxu0 0.0
    %2096 = vmatpush1.msra.mxu0 0.0
    %2097 = vmatprep.subr.mxu0 0.0
    %2098 = vmatpush1.msra.mxu0 0.0
    %2099 = vmatprep.subr.mxu0 0.0
    %2100 = vmatpush1.msra.mxu0 0.0
    %2101 = vmatprep.subr.mxu0 0.0
    %2102 = vmatpush1.msra.mxu0 0.0
    %2103 = vmatprep.subr.mxu0 0.0
    %2104 = vmatpush1.msra.mxu0 0.0
    %2105 = vmatprep.subr.mxu0 0.0
    %2106 = vmatpush1.msra.mxu0 0.0
    %2107 = vmatprep.subr.mxu0 0.0
    %2108 = vmatpush1.msra.mxu0 0.0
    %2109 = vmatprep.subr.mxu0 0.0
    %2110 = vmatpush1.msra.mxu0 0.0
    %2111 = vmatprep.subr.mxu0 0.0
    %2112 = vmatpush1.msra.mxu0 0.0
    %2113 = vmatprep.subr.mxu0 0.0
    %2114 = vmatpush1.msra.mxu0 0.0
    %2115 = vmatprep.subr.mxu0 0.0
    %2116 = vmatpush1.msra.mxu0 0.0
    %2117 = vmatprep.subr.mxu0 0.0
    %2118 = vmatpush1.msra.mxu0 0.0
    %2119 = vmatprep.subr.mxu0 0.0
    %2120 = vmatpush1.msra.mxu0 0.0
    %2121 = vmatprep.subr.mxu0 0.0
    %2122 = vmatpush1.msra.mxu0 0.0
    %2123 = vmatprep.subr.mxu0 0.0
    %2124 = vmatpush1.msra.mxu0 0.0
    %2125 = vmatprep.subr.mxu0 0.0
    %2126 = vmatpush1.msra.mxu0 0.0
    %2127 = vmatprep.subr.mxu0 0.0
    %2128 = vmatpush1.msra.mxu0 0.0
    %2129 = vmatprep.subr.mxu0 0.0
    %2130 = vmatpush1.msra.mxu0 0.0
    %2131 = vmatprep.subr.mxu0 0.0
    %2132 = vmatpush1.msra.mxu0 0.0
    %2133 = vmatprep.subr.mxu0 0.0
    %2134 = vmatpush1.msra.mxu0 0.0
    %2135 = vmatprep.subr.mxu0 0.0
    %2136 = vmatpush1.msra.mxu0 0.0
    %2137 = vmatprep.subr.mxu0 0.0
    %2138 = vmatpush1.msra.mxu0 0.0
    %2139 = vmatprep.subr.mxu0 0.0
    %2140 = vmatpush1.msra.mxu0 0.0
    %2141 = vmatprep.mubr.f32.mxu0 0.0
    %2142 = vmatmul.mubr.f32.gmra.mrb[0].mxu0 %v2072
    %v2143 = vpop.f32.mrb[0].mxu0
    %v2144 = vadd.f32 %v976, %v2143
    %v2145 = vpop.f32.mrb[0].mxu0
    %2146 = vmatprep.mubr.f32.mxu0 0.0
    %2147 = vmatmul.mubr.f32.gmra.mrb[0].mxu0 %v2075
    %v2148 = vpop.f32.mrb[0].mxu0
    %v2149 = vadd.f32 %v976, %v2148
    %v2150 = vpop.f32.mrb[0].mxu0
    %2151 = vdwg.mxu0
    %v2152 = vmax.f32 %v2144, 0.0
    %v2153 = vmax.f32 %v2149, 0.0
    %v2155 = vsel %vm1064, %v2152, 0
    %v2158 = vsel %vm1064, %v2153, 0
    %2160 = vmatprep.subr.mxu0 0.0
    %2161 = vmatpush1.msra.mxu0 %v41
    %2162 = vmatprep.subr.mxu0 0.0
    %2163 = vmatpush1.msra.mxu0 %v42
    %2164 = vmatprep.subr.mxu0 0.0
    %2165 = vmatpush1.msra.mxu0 %v43
    %2166 = vmatprep.subr.mxu0 0.0
    %2167 = vmatpush1.msra.mxu0 %v44
    %2168 = vmatprep.subr.mxu0 0.0
    %2169 = vmatpush1.msra.mxu0 %v45
    %2170 = vmatprep.subr.mxu0 0.0
    %2171 = vmatpush1.msra.mxu0 %v46
    %2172 = vmatprep.subr.mxu0 0.0
    %2173 = vmatpush1.msra.mxu0 %v47
    %2174 = vmatprep.subr.mxu0 0.0
    %2175 = vmatpush1.msra.mxu0 %v48
    %2176 = vmatprep.subr.mxu0 0.0
    %2177 = vmatpush1.msra.mxu0 0.0
    %2178 = vmatprep.subr.mxu0 0.0
    %2179 = vmatpush1.msra.mxu0 0.0
    %2180 = vmatprep.subr.mxu0 0.0
    %2181 = vmatpush1.msra.mxu0 0.0
    %2182 = vmatprep.subr.mxu0 0.0
    %2183 = vmatpush1.msra.mxu0 0.0
    %2184 = vmatprep.subr.mxu0 0.0
    %2185 = vmatpush1.msra.mxu0 0.0
    %2186 = vmatprep.subr.mxu0 0.0
    %2187 = vmatpush1.msra.mxu0 0.0
    %2188 = vmatprep.subr.mxu0 0.0
    %2189 = vmatpush1.msra.mxu0 0.0
    %2190 = vmatprep.subr.mxu0 0.0
    %2191 = vmatpush1.msra.mxu0 0.0
    %2192 = vmatprep.subr.mxu0 0.0
    %2193 = vmatpush1.msra.mxu0 0.0
    %2194 = vmatprep.subr.mxu0 0.0
    %2195 = vmatpush1.msra.mxu0 0.0
    %2196 = vmatprep.subr.mxu0 0.0
    %2197 = vmatpush1.msra.mxu0 0.0
    %2198 = vmatprep.subr.mxu0 0.0
    %2199 = vmatpush1.msra.mxu0 0.0
    %2200 = vmatprep.subr.mxu0 0.0
    %2201 = vmatpush1.msra.mxu0 0.0
    %2202 = vmatprep.subr.mxu0 0.0
    %2203 = vmatpush1.msra.mxu0 0.0
    %2204 = vmatprep.subr.mxu0 0.0
    %2205 = vmatpush1.msra.mxu0 0.0
    %2206 = vmatprep.subr.mxu0 0.0
    %2207 = vmatpush1.msra.mxu0 0.0
    %2208 = vmatprep.subr.mxu0 0.0
    %2209 = vmatpush1.msra.mxu0 0.0
    %2210 = vmatprep.subr.mxu0 0.0
    %2211 = vmatpush1.msra.mxu0 0.0
    %2212 = vmatprep.subr.mxu0 0.0
    %2213 = vmatpush1.msra.mxu0 0.0
    %2214 = vmatprep.subr.mxu0 0.0
    %2215 = vmatpush1.msra.mxu0 0.0
    %2216 = vmatprep.subr.mxu0 0.0
    %2217 = vmatpush1.msra.mxu0 0.0
    %2218 = vmatprep.subr.mxu0 0.0
    %2219 = vmatpush1.msra.mxu0 0.0
    %2220 = vmatprep.subr.mxu0 0.0
    %2221 = vmatpush1.msra.mxu0 0.0
    %2222 = vmatprep.subr.mxu0 0.0
    %2223 = vmatpush1.msra.mxu0 0.0
    %2224 = vmatprep.mubr.f32.mxu0 0.0
    %2225 = vmatmul.mubr.f32.gmra.mrb[0].mxu0 %v2155
    %v2226 = vpop.f32.mrb[0].mxu0
    %v2227 = vadd.f32 %v1063, %v2226
    %v2228 = vpop.f32.mrb[0].mxu0
    %2229 = vmatprep.mubr.f32.mxu0 0.0
    %2230 = vmatmul.mubr.f32.gmra.mrb[0].mxu0 %v2158
    %v2231 = vpop.f32.mrb[0].mxu0
    %v2232 = vadd.f32 %v1063, %v2231
    %v2233 = vpop.f32.mrb[0].mxu0
    %2234 = vdwg.mxu0
    %v2235 = vld [vmem:[%s0 + $0x30] sm:$0xff]
    %v2236 = vld [vmem:[%s0 + $0x38] sm:$0xff]
    %v2237 = vadd.f32 %v2069, %v2227
    %v2238 = vadd.f32 %v2070, %v2232
    %v2239 = vadd.f32 %v2237, %v2235
    %v2240 = vadd.f32 %v2238, %v2236
    %v2241 = vsel %vm53, %v2239, 0.0
    %2242 = vadd.xlane.f32.xlu0 %v2241
    %v2243 = vpop.xlane.xlu0 %2242
    %v2244 = vsel %vm53, %v2240, 0.0
    %2245 = vadd.xlane.f32.xlu0 %v2244
    %v2246 = vpop.xlane.xlu0 %2245
    %v2247 = vmul.f32 %v2243, %v60
    %v2248 = vmul.f32 %v2246, %v60
    %v2249 = vsub.f32 %v2239, %v2247
    %v2250 = vsub.f32 %v2240, %v2248
    %v2251 = vmul.f32 %v2249, %v2249
    %v2252 = vmul.f32 %v2250, %v2250
    %v2253 = vsel %vm53, %v2251, 0.0
    %2254 = vadd.xlane.f32.xlu0 %v2253
    %v2255 = vpop.xlane.xlu0 %2254
    %v2256 = vsel %vm53, %v2252, 0.0
    %2257 = vadd.xlane.f32.xlu0 %v2256
    %v2258 = vpop.xlane.xlu0 %2257
    %v2259 = vmul.f32 %v2255, %v60
    %v2260 = vmul.f32 %v2258, %v60
    %v2261 = vadd.f32 %v2259, 1e-05
    %v2262 = vadd.f32 %v2260, 1e-05
    %v2263 = vrsqrt.pop %v2261
    %v2264 = vrsqrt.pop %v2262
    %v2265 = vmul.f32 %v2249, %v2263
    %v2266 = vmul.f32 %v2250, %v2264
    %v2267 = vld [vmem:[%s0 + $0x87] sm:$0x1]
    %v2268 = vlaneseq
    %v2269 = vshrl.u32 %v2268, 7
    %v2270 = vsub.s32 0, %v2269
    %v2271 = vrot.slane %v2267, %v2270
    %v2272 = vmul.f32 %v2265, %v2271
    %v2273 = vmul.f32 %v2266, %v2271
    %v2274 = vld [vmem:[%s0 + $0x88] sm:$0x1]
    %v2275 = vlaneseq
    %v2276 = vshrl.u32 %v2275, 7
    %v2277 = vsub.s32 0, %v2276
    %v2278 = vrot.slane %v2274, %v2277
    %v2279 = vadd.f32 %v2272, %v2278
    %v2280 = vadd.f32 %v2273, %v2278
    %v2281 = vld [vmem:[#allocation2] sm:$0xff]
    %v2282 = vld [vmem:[#allocation2 + $0x8] sm:$0xff]
    %v2283 = vld [vmem:[#allocation2 + $0x10] sm:$0xff]
    %v2284 = vld [vmem:[#allocation2 + $0x18] sm:$0xff]
    %v2285 = vld [vmem:[#allocation2 + $0x20] sm:$0x1]
    %v2286 = vlaneseq
    %v2287 = vshrl.u32 %v2286, 7
    %v2288 = vsub.s32 0, %v2287
    %v2289 = vrot.slane %v2285, %v2288
    %v2291 = vsel %vm53, %v2279, 0
    %v2294 = vsel %vm53, %v2280, 0
    %2296 = vmatprep.subr.mxu0 0.0
    %2297 = vmatpush1.msra.mxu0 %v2281
    %2298 = vmatprep.subr.mxu0 0.0
    %2299 = vmatpush1.msra.mxu0 %v2282
    %2300 = vmatprep.subr.mxu0 0.0
    %2301 = vmatpush1.msra.mxu0 %v2283
    %2302 = vmatprep.subr.mxu0 0.0
    %2303 = vmatpush1.msra.mxu0 %v2284
    %2304 = vmatprep.subr.mxu0 0.0
    %2305 = vmatpush1.msra.mxu0 0.0
    %2306 = vmatprep.subr.mxu0 0.0
    %2307 = vmatpush1.msra.mxu0 0.0
    %2308 = vmatprep.subr.mxu0 0.0
    %2309 = vmatpush1.msra.mxu0 0.0
    %2310 = vmatprep.subr.mxu0 0.0
    %2311 = vmatpush1.msra.mxu0 0.0
    %2312 = vmatprep.subr.mxu0 0.0
    %2313 = vmatpush1.msra.mxu0 0.0
    %2314 = vmatprep.subr.mxu0 0.0
    %2315 = vmatpush1.msra.mxu0 0.0
    %2316 = vmatprep.subr.mxu0 0.0
    %2317 = vmatpush1.msra.mxu0 0.0
    %2318 = vmatprep.subr.mxu0 0.0
    %2319 = vmatpush1.msra.mxu0 0.0
    %2320 = vmatprep.subr.mxu0 0.0
    %2321 = vmatpush1.msra.mxu0 0.0
    %2322 = vmatprep.subr.mxu0 0.0
    %2323 = vmatpush1.msra.mxu0 0.0
    %2324 = vmatprep.subr.mxu0 0.0
    %2325 = vmatpush1.msra.mxu0 0.0
    %2326 = vmatprep.subr.mxu0 0.0
    %2327 = vmatpush1.msra.mxu0 0.0
    %2328 = vmatprep.subr.mxu0 0.0
    %2329 = vmatpush1.msra.mxu0 0.0
    %2330 = vmatprep.subr.mxu0 0.0
    %2331 = vmatpush1.msra.mxu0 0.0
    %2332 = vmatprep.subr.mxu0 0.0
    %2333 = vmatpush1.msra.mxu0 0.0
    %2334 = vmatprep.subr.mxu0 0.0
    %2335 = vmatpush1.msra.mxu0 0.0
    %2336 = vmatprep.subr.mxu0 0.0
    %2337 = vmatpush1.msra.mxu0 0.0
    %2338 = vmatprep.subr.mxu0 0.0
    %2339 = vmatpush1.msra.mxu0 0.0
    %2340 = vmatprep.subr.mxu0 0.0
    %2341 = vmatpush1.msra.mxu0 0.0
    %2342 = vmatprep.subr.mxu0 0.0
    %2343 = vmatpush1.msra.mxu0 0.0
    %2344 = vmatprep.subr.mxu0 0.0
    %2345 = vmatpush1.msra.mxu0 0.0
    %2346 = vmatprep.subr.mxu0 0.0
    %2347 = vmatpush1.msra.mxu0 0.0
    %2348 = vmatprep.subr.mxu0 0.0
    %2349 = vmatpush1.msra.mxu0 0.0
    %2350 = vmatprep.subr.mxu0 0.0
    %2351 = vmatpush1.msra.mxu0 0.0
    %2352 = vmatprep.subr.mxu0 0.0
    %2353 = vmatpush1.msra.mxu0 0.0
    %2354 = vmatprep.subr.mxu0 0.0
    %2355 = vmatpush1.msra.mxu0 0.0
    %2356 = vmatprep.subr.mxu0 0.0
    %2357 = vmatpush1.msra.mxu0 0.0
    %2358 = vmatprep.subr.mxu0 0.0
    %2359 = vmatpush1.msra.mxu0 0.0
    %2360 = vmatprep.mubr.f32.mxu0 0.0
    %2361 = vmatmul.mubr.f32.gmra.mrb[0].mxu0 %v2291
    %v2362 = vpop.f32.mrb[0].mxu0
    %v2363 = vadd.f32 %v2289, %v2362
    %v2364 = vpop.f32.mrb[0].mxu0
    %2365 = vmatprep.mubr.f32.mxu0 0.0
    %2366 = vmatmul.mubr.f32.gmra.mrb[0].mxu0 %v2294
    %v2367 = vpop.f32.mrb[0].mxu0
    %v2368 = vadd.f32 %v2289, %v2367
    %v2369 = vpop.f32.mrb[0].mxu0
    %2370 = vdwg.mxu0
    %2371 = vst [vmem:[#allocation5] sm:$0xff] %v2363
    %2372 = vst [vmem:[#allocation5 + $0x8] sm:$0xff] %v2368
    // Predicated region
    $region22: #{tpu_custom_call.1} parent=1 // pred_check
      _
    $region23: #{tpu_custom_call.1} parent=1 // pred_check_branch
      %2374 = sbr.rel (0) target = $region25
    $region24: #{tpu_custom_call.1} parent=1 // pred_region
      %s2376 = ssub.s32 256, 256
      %2377 = vsyncadd [#allocation4], %s2376
      %s2378 = sshll.u32 [#allocation5], 4
      %s2379 = int_to_ptr.vmem [resolvable:$true] %s2378
      %2384 = dma.vmem_to_hbm [thread:$0]  %s2379, 256, %s4, [#allocation4], 128, 128, 8
    $region25: #{tpu_custom_call.1} parent=1 // pred_fallthru
      _
    // Predicated region
    $region26: #{tpu_custom_call.1} parent=1 // pred_check
      _
    $region27: #{tpu_custom_call.1} parent=1 // pred_check_branch
      %2386 = sbr.rel (0) target = $region29
    $region28: #{tpu_custom_call.1} parent=1 // pred_region
      %2387 = dma.done [#allocation4], 256
    $region29: #{tpu_custom_call.1} parent=1 // pred_fallthru
      _
    %2388 = vsyncpa [#allocation3], 1
    %2389 = vsyncpa [#allocation4], 1

</llo_original>
